<compile_context>
chip_gen: v6e
topology: v6e:2x2x1
jax: 0.10.0
libtpu: 0.0.40
codegen_flags: <defaults>
</compile_context>

<pallas_src>
import jax
import jax.numpy as jnp
from jax.experimental import pallas as pl
from jax.experimental.pallas import tpu as pltpu

EPS = 1e-5


def _bn_relu_kernel(x_ref, gb_ref, o_ref):
    # x_ref: (N, C_blk, HW) f32 ; gb_ref: (C_blk, 2) f32 [gamma | beta]
    n, _, hw = x_ref.shape
    inv_n = 1.0 / float(n * hw)

    # ---- stats phase: mean ----
    # Batch-axis reduce first (VPU adds; free squeeze at N=1), then a single
    # lane (axis=-1) reduce per channel on the XLU.
    xs = jnp.sum(x_ref[...], axis=0)                                # (C_blk, HW)
    mean = (jnp.sum(xs, axis=1, keepdims=True) * inv_n)[None]       # (1, C_blk, 1)

    # ---- stats phase: two-pass (numerically robust) variance ----
    d = x_ref[...] - mean                                           # re-read x
    ds = jnp.sum(d * d, axis=0)                                     # (C_blk, HW)
    var = (jnp.sum(ds, axis=1, keepdims=True) * inv_n)[None]        # (1, C_blk, 1)
    inv_std = jax.lax.rsqrt(var + EPS)                              # EUP rsqrt

    g = gb_ref[:, 0:1][None]                                        # (1, C_blk, 1)
    b = gb_ref[:, 1:2][None]                                        # (1, C_blk, 1)
    scale = g * inv_std                                             # per-channel scale
    bias = b - mean * scale                                         # per-channel bias

    # ---- elementwise phase: re-read x; mul + add + max only ----
    o_ref[...] = jnp.maximum(x_ref[...] * scale + bias, 0.0)


def _pick_channel_block(C, target=384, cores=2):
    """Largest multiple-of-8 divisor of C <= target, preferring an even grid
    count so v7x's two TensorCores split the work evenly."""
    if C % 8 != 0:
        return C
    cands = [blk for blk in range(8, min(C, target) + 1, 8) if C % blk == 0]
    if not cands:
        return C
    even = [blk for blk in cands if (C // blk) % cores == 0]
    pool = even if even else cands
    return max(pool)


def _round_up(v, m):
    return (v + m - 1) // m * m


def batchnorm_relu(x_nchw, gamma, beta):
    """x_nchw: (N, C, H, W) f32; gamma, beta: (C,) f32."""
    N, C, H, W = x_nchw.shape
    HW = H * W

    # Free, contiguous reshapes: no layout-changing transposes.
    x3d = x_nchw.reshape(N, C, HW)
    gb = jnp.stack([gamma, beta], axis=1)         # (C, 2): one fused param DMA

    c_blk = _pick_channel_block(C)
    grid = (C // c_blk,)

    # Explicit scoped-VMEM budget: double-buffered (in + out) tiles with the
    # lane axis padded to 128, plus headroom; clamped below v7x's 64 MiB.
    tile_bytes = N * c_blk * _round_up(HW, 128) * 4
    vmem_need = 2 * 2 * tile_bytes                # 2 buffers x (in + out)
    vmem_limit = int(min(max(2 * vmem_need, 16 << 20), 48 << 20))

    out3d = pl.pallas_call(
        _bn_relu_kernel,
        out_shape=jax.ShapeDtypeStruct((N, C, HW), x3d.dtype),
        grid=grid,
        in_specs=[
            pl.BlockSpec((N, c_blk, HW), lambda i: (0, i, 0)),
            pl.BlockSpec((c_blk, 2), lambda i: (i, 0)),
        ],
        out_specs=pl.BlockSpec((N, c_blk, HW), lambda i: (0, i, 0)),
        compiler_params=pltpu.CompilerParams(
            dimension_semantics=("parallel",),
            vmem_limit_bytes=vmem_limit,
        ),
    )(x3d, gb)

    return out3d.reshape(N, C, H, W)


if __name__ == "__main__":
    key = jax.random.PRNGKey(0)
    k_x, k_g, k_b, k_off = jax.random.split(key, 4)

    N, C, H, W = 1, 720, 14, 14

    # Non-zero per-channel means (like post-conv activations) so that the
    # variance path is actually exercised away from the trivial regime.
    chan_off = 3.0 * jax.random.normal(k_off, (1, C, 1, 1), dtype=jnp.float32)
    x = 0.5 * jax.random.normal(k_x, (N, C, H, W), dtype=jnp.float32) + chan_off

    # PyTorch default init is gamma=1, beta=0; perturb so the affine matters.
    gamma = 1.0 + 0.1 * jax.random.normal(k_g, (C,), dtype=jnp.float32)
    beta = 0.1 * jax.random.normal(k_b, (C,), dtype=jnp.float32)

    out = batchnorm_relu(x, gamma, beta)
    out = jax.block_until_ready(out)

    # Plain-JAX reference: training-mode BN (batch stats, biased var) + ReLU.
    mean = jnp.mean(x, axis=(0, 2, 3), keepdims=True)
    var = jnp.mean((x - mean) ** 2, axis=(0, 2, 3), keepdims=True)
    ref = (x - mean) * jax.lax.rsqrt(var + EPS)
    ref = ref * gamma.reshape(1, C, 1, 1) + beta.reshape(1, C, 1, 1)
    ref = jnp.maximum(ref, 0.0)

    assert out.shape == (N, C, H, W)
    assert jnp.max(jnp.abs(out - ref)) < 1e-4

    print("KERNEL_OK")
</pallas_src>

<mosaic_0001>
module attributes {stable_mosaic.version = 11 : i64} {
  func.func @_bn_relu_kernel(%arg0: i32, %arg1: memref<1x360x196xf32, #tpu.memory_space<vmem>>, %arg2: memref<360x2xf32, #tpu.memory_space<vmem>>, %arg3: memref<1x360x196xf32, #tpu.memory_space<vmem>>) attributes {dimension_semantics = [#tpu.dimension_semantics<parallel>], iteration_bounds = array<i64: 2>, scalar_prefetch = 0 : i64, scratch_operands = 0 : i64, tpu.core_type = #tpu.core_type<tc>, window_params = [{transform_indices = @transform_0, window_bounds = array<i64: 1, 360, 196>}, {transform_indices = @transform_1, window_bounds = array<i64: 360, 2>}, {transform_indices = @transform_2, window_bounds = array<i64: 1, 360, 196>}]} {
    %c0 = arith.constant 0 : index
    %c0_0 = arith.constant 0 : index
    %c0_1 = arith.constant 0 : index
    %0 = vector.load %arg1[%c0, %c0_0, %c0_1] : memref<1x360x196xf32, #tpu.memory_space<vmem>>, vector<1x360x196xf32>
    %cst = arith.constant dense<0.000000e+00> : vector<360x196xf32>
    %1 = vector.multi_reduction <add>, %0, %cst [0] : vector<1x360x196xf32> to vector<360x196xf32>
    %cst_2 = arith.constant dense<0.000000e+00> : vector<360xf32>
    %2 = vector.multi_reduction <add>, %1, %cst_2 [1] : vector<360x196xf32> to vector<360xf32>
    %3 = vector.shape_cast %2 : vector<360xf32> to vector<360x1xf32>
    %cst_3 = arith.constant 0.00510204071 : f32
    %4 = vector.broadcast %cst_3 : f32 to vector<360x1xf32>
    %5 = arith.mulf %3, %4 : vector<360x1xf32>
    %6 = vector.shape_cast %5 : vector<360x1xf32> to vector<1x360x1xf32>
    %c0_4 = arith.constant 0 : index
    %c0_5 = arith.constant 0 : index
    %c0_6 = arith.constant 0 : index
    %7 = vector.load %arg1[%c0_4, %c0_5, %c0_6] : memref<1x360x196xf32, #tpu.memory_space<vmem>>, vector<1x360x196xf32>
    %8 = vector.broadcast %6 : vector<1x360x1xf32> to vector<1x360x196xf32>
    %9 = arith.subf %7, %8 : vector<1x360x196xf32>
    %10 = arith.mulf %9, %9 : vector<1x360x196xf32>
    %cst_7 = arith.constant dense<0.000000e+00> : vector<360x196xf32>
    %11 = vector.multi_reduction <add>, %10, %cst_7 [0] : vector<1x360x196xf32> to vector<360x196xf32>
    %cst_8 = arith.constant dense<0.000000e+00> : vector<360xf32>
    %12 = vector.multi_reduction <add>, %11, %cst_8 [1] : vector<360x196xf32> to vector<360xf32>
    %13 = vector.shape_cast %12 : vector<360xf32> to vector<360x1xf32>
    %cst_9 = arith.constant 0.00510204071 : f32
    %14 = vector.broadcast %cst_9 : f32 to vector<360x1xf32>
    %15 = arith.mulf %13, %14 : vector<360x1xf32>
    %16 = vector.shape_cast %15 : vector<360x1xf32> to vector<1x360x1xf32>
    %cst_10 = arith.constant 9.99999974E-6 : f32
    %17 = vector.broadcast %cst_10 : f32 to vector<1x360x1xf32>
    %18 = arith.addf %16, %17 : vector<1x360x1xf32>
    %19 = math.rsqrt %18 : vector<1x360x1xf32>
    %c0_11 = arith.constant 0 : index
    %c0_12 = arith.constant 0 : index
    %20 = vector.load %arg2[%c0_11, %c0_12] : memref<360x2xf32, #tpu.memory_space<vmem>>, vector<360x1xf32>
    %21 = vector.shape_cast %20 : vector<360x1xf32> to vector<1x360x1xf32>
    %c0_13 = arith.constant 0 : index
    %c1 = arith.constant 1 : index
    %22 = vector.load %arg2[%c0_13, %c1] : memref<360x2xf32, #tpu.memory_space<vmem>>, vector<360x1xf32>
    %23 = vector.shape_cast %22 : vector<360x1xf32> to vector<1x360x1xf32>
    %24 = arith.mulf %21, %19 : vector<1x360x1xf32>
    %25 = arith.mulf %6, %24 : vector<1x360x1xf32>
    %26 = arith.subf %23, %25 : vector<1x360x1xf32>
    %c0_14 = arith.constant 0 : index
    %c0_15 = arith.constant 0 : index
    %c0_16 = arith.constant 0 : index
    %27 = vector.load %arg1[%c0_14, %c0_15, %c0_16] : memref<1x360x196xf32, #tpu.memory_space<vmem>>, vector<1x360x196xf32>
    %28 = vector.broadcast %24 : vector<1x360x1xf32> to vector<1x360x196xf32>
    %29 = arith.mulf %27, %28 : vector<1x360x196xf32>
    %30 = vector.broadcast %26 : vector<1x360x1xf32> to vector<1x360x196xf32>
    %31 = arith.addf %29, %30 : vector<1x360x196xf32>
    %cst_17 = arith.constant 0.000000e+00 : f32
    %32 = vector.broadcast %cst_17 : f32 to vector<1x360x196xf32>
    %33 = arith.maximumf %31, %32 : vector<1x360x196xf32>
    %c0_18 = arith.constant 0 : index
    %c0_19 = arith.constant 0 : index
    %c0_20 = arith.constant 0 : index
    %34 = vector.load %arg3[%c0_18, %c0_19, %c0_20] : memref<1x360x196xf32, #tpu.memory_space<vmem>>, vector<1x360x196xf32>
    tpu.vector_store %arg3[%c0_18, %c0_19, %c0_20], %33 {strides = array<i32>} : memref<1x360x196xf32, #tpu.memory_space<vmem>>, vector<1x360x196xf32>,
    return
  }
  func.func @transform_0(%arg0: i32) -> (i32, i32, i32) {
    %c0_i32 = arith.constant 0 : i32
    %c0_i32_0 = arith.constant 0 : i32
    %c0_i32_1 = arith.constant 0 : i32
    return %c0_i32, %arg0, %c0_i32_0 : i32, i32, i32
  }
  func.func @transform_1(%arg0: i32) -> (i32, i32) {
    %c0_i32 = arith.constant 0 : i32
    %c0_i32_0 = arith.constant 0 : i32
    return %arg0, %c0_i32 : i32, i32
  }
  func.func @transform_2(%arg0: i32) -> (i32, i32, i32) {
    %c0_i32 = arith.constant 0 : i32
    %c0_i32_0 = arith.constant 0 : i32
    %c0_i32_1 = arith.constant 0 : i32
    return %c0_i32, %arg0, %c0_i32_0 : i32, i32, i32
  }
}

</mosaic_0001>

<llo_original>
// kernel: tpu_custom_call.1
$region0: #{tpu_custom_call.1}
  #allocation0 [shape = 'u32[]', space=smem, size = 0x4, offset = 0x4, fixed_abs, tag = 'smem constant byte address 0x4 - core index']
  #allocation1 [shape = 'u32[144,128]{1,0:T(1,128)}', space=vmem, size = 0x12000, scoped, tag = 'internal scratch']
  %s0 = inlined_call_operand.vmem [shape: f32[1,720,196], index: 0, kind: input, shape index: {}]
  %s1 = inlined_call_operand.vmem [shape: f32[720,2], index: 1, kind: input, shape index: {}]
  %s2 = inlined_call_operand.vmem [shape: f32[1,720,196], index: 2, kind: output, shape index: {}]
  %s3 = sld [smem:[#allocation0]]
  $region41: #{tpu_custom_call.1} parent=0
    _
  %s5 = ssub.s32 1, %s3
  %s6 = scalar_select 0, %s5, %s3
  loop: start=0, step=1, limit=4
  $region2: #{tpu_custom_call.1} parent=0 // loop_pre_header
    _
  $region3: #{tpu_custom_call.1} parent=0 // loop_header
    %s8 = sphi 0, %s12
    %p9 = scmp.ge.s32.totalorder %s8, 4
    %s18 = sphi 0, %s20
    %s21 = sphi 0, %s18
    %s22 = sphi 0, %s21
    %s38 = sphi 0, %s22
    %s44 = sphi 0, %s46
    %s47 = sphi 0, %s44
    %s48 = sphi 0, %s47
    %s64 = sphi 0, %s48
    %s70 = sphi 0, %s72
    %s73 = sphi 0, %s70
    %s74 = sphi 0, %s73
    %s90 = sphi 0, %s74
  $region4: #{tpu_custom_call.1} parent=0 // loop_header_branch
    %11 = sbr.rel (%p9) target = $region8
  $region5: #{tpu_custom_call.1} parent=0 // loop_body
    %s13 = ssub.s32 %s8, 1
    %s14 = ssub.s32 %s8, 2
    %s15 = sadd.s32 %s8, 1
    %s16 = ssub.s32 %s8, %s15
    %p17 = scmp.eq.s32.totalorder %s16, 0
    %s19 = sadd.s32 %s18, 1
    %s20 = scalar_select %p17, %s18, %s19
    %p23 = pneg %p17
    %p24 = scmp.eq.s32.totalorder %s8, 1
    %p25 = por %p23, %p24
    %p26 = scmp.ne.s32.totalorder %s18, %s21
    %p27 = scmp.eq.s32.totalorder %s8, 0
    %p28 = por %p26, %p27
    %p29 = scmp.ne.s32.totalorder %s18, %s21
    %p30 = scmp.eq.s32.totalorder %s13, 1
    %p31 = por %p29, %p30
    %p32 = scmp.ne.s32.totalorder %s21, %s22
    %p33 = scmp.eq.s32.totalorder %s13, 0
    %p34 = por %p32, %p33
    %p35 = scmp.ne.s32.totalorder %s21, %s22
    %p36 = scmp.eq.s32.totalorder %s14, 1
    %p37 = por %p35, %p36
    %p39 = scmp.ne.s32.totalorder %s22, %s38
    %p40 = scmp.eq.s32.totalorder %s14, 0
    %p41 = por %p39, %p40
    %s42 = ssub.s32 %s8, %s15
    %p43 = scmp.eq.s32.totalorder %s42, 0
    %s45 = sadd.s32 %s44, 1
    %s46 = scalar_select %p43, %s44, %s45
    %p49 = pneg %p43
    %p50 = scmp.eq.s32.totalorder %s8, 1
    %p51 = por %p49, %p50
    %p52 = scmp.ne.s32.totalorder %s44, %s47
    %p53 = scmp.eq.s32.totalorder %s8, 0
    %p54 = por %p52, %p53
    %p55 = scmp.ne.s32.totalorder %s44, %s47
    %p56 = scmp.eq.s32.totalorder %s13, 1
    %p57 = por %p55, %p56
    %p58 = scmp.ne.s32.totalorder %s47, %s48
    %p59 = scmp.eq.s32.totalorder %s13, 0
    %p60 = por %p58, %p59
    %p61 = scmp.ne.s32.totalorder %s47, %s48
    %p62 = scmp.eq.s32.totalorder %s14, 1
    %p63 = por %p61, %p62
    %p65 = scmp.ne.s32.totalorder %s48, %s64
    %p66 = scmp.eq.s32.totalorder %s14, 0
    %p67 = por %p65, %p66
    %s68 = ssub.s32 %s8, %s15
    %p69 = scmp.eq.s32.totalorder %s68, 0
    %s71 = sadd.s32 %s70, 1
    %s72 = scalar_select %p69, %s70, %s71
    %p75 = pneg %p69
    %p76 = scmp.eq.s32.totalorder %s8, 1
    %p77 = por %p75, %p76
    %p78 = scmp.ne.s32.totalorder %s70, %s73
    %p79 = scmp.eq.s32.totalorder %s8, 0
    %p80 = por %p78, %p79
    %p81 = scmp.ne.s32.totalorder %s70, %s73
    %p82 = scmp.eq.s32.totalorder %s13, 1
    %p83 = por %p81, %p82
    %p84 = scmp.ne.s32.totalorder %s73, %s74
    %p85 = scmp.eq.s32.totalorder %s13, 0
    %p86 = por %p84, %p85
    %p87 = scmp.ne.s32.totalorder %s73, %s74
    %p88 = scmp.eq.s32.totalorder %s14, 1
    %p89 = por %p87, %p88
    %p91 = scmp.ne.s32.totalorder %s74, %s90
    %p92 = scmp.eq.s32.totalorder %s14, 0
    %p93 = por %p91, %p92
    %p94 = scmp.le.s32.totalorder 1, %s8
    %p95 = scmp.lt.s32.totalorder %s8, 3
    %p96 = pnand %p94, %p95
    %p97 = pneg %p96
    // Predicated region
    $region9: #{tpu_custom_call.1} parent=5 // pred_check
      _
    $region10: #{tpu_custom_call.1} parent=5 // pred_check_branch
      %99 = sbr.rel (%p96) target = $region12
    $region11: #{tpu_custom_call.1} parent=5 // pred_region
      %s100 = ssub.s32 %s8, 1
    $region12: #{tpu_custom_call.1} parent=5 // pred_fallthru
      _
    %p101 = scmp.lt.s32.totalorder %s8, 2
    // Predicated region
    $region13: #{tpu_custom_call.1} parent=5 // pred_check
      %p102 = pneg %p101
    $region14: #{tpu_custom_call.1} parent=5 // pred_check_branch
      %104 = sbr.rel (%p102) target = $region16
    $region15: #{tpu_custom_call.1} parent=5 // pred_region
      // Predicated region
      $region17: #{tpu_custom_call.1} parent=15 // pred_check
        %p105 = pneg %p28
      $region18: #{tpu_custom_call.1} parent=15 // pred_check_branch
        %107 = sbr.rel (%p105) target = $region20
      $region19: #{tpu_custom_call.1} parent=15 // pred_region
        %s108 = smul.u32 45, %s8
        %p109 = scmp.lt.s32.totalorder %s108, 89
        %s110 = scalar_select %p109, %s108, 89
        %s111 = smul.addr %s110, 2
        %s112 = smul.addr %s111, 8
        %s113 = scalar_lea.vmem %s0, %s112
        %s114 = smul.u32 45, %s8
      $region20: #{tpu_custom_call.1} parent=15 // pred_fallthru
        _
      // Predicated region
      $region21: #{tpu_custom_call.1} parent=15 // pred_check
        %p115 = pneg %p54
      $region22: #{tpu_custom_call.1} parent=15 // pred_check_branch
        %117 = sbr.rel (%p115) target = $region24
      $region23: #{tpu_custom_call.1} parent=15 // pred_region
        %s118 = smul.u32 45, %s8
        %p119 = scmp.lt.s32.totalorder %s118, 89
        %s120 = scalar_select %p119, %s118, 89
        %s121 = smul.addr %s120, 8
        %s122 = scalar_lea.vmem %s1, %s121
        %s123 = smul.u32 45, %s8
      $region24: #{tpu_custom_call.1} parent=15 // pred_fallthru
        _
    $region16: #{tpu_custom_call.1} parent=5 // pred_fallthru
      _
    %p124 = scmp.le.s32.totalorder 1, %s8
    %p125 = scmp.lt.s32.totalorder %s8, 3
    %p126 = pnand %p124, %p125
    %p127 = pneg %p126
    // Predicated region
    $region25: #{tpu_custom_call.1} parent=5 // pred_check
      _
    $region26: #{tpu_custom_call.1} parent=5 // pred_check_branch
      %129 = sbr.rel (%p126) target = $region28
    $region27: #{tpu_custom_call.1} parent=5 // pred_region
      %s130 = ssub.s32 %s8, 1
      %s131 = smul.u32 45, %s13
      %p132 = scmp.lt.s32.totalorder %s131, 89
      %s133 = scalar_select %p132, %s131, 89
      %s134 = smul.addr %s133, 2
      %s135 = smul.addr %s134, 8
      %s136 = scalar_lea.vmem %s0, %s135
      %p137 = pneg %p34
      %p138 = pneg %p31
      %s139 = smul.u32 45, %s13
      %p140 = scmp.lt.s32.totalorder %s139, 89
      %s141 = scalar_select %p140, %s139, 89
      %s142 = smul.addr %s141, 8
      %s143 = scalar_lea.vmem %s1, %s142
      %p144 = pneg %p60
      %p145 = pneg %p57
      %p146 = pneg %p86
      %p147 = pneg %p83
      %s148 = smul.u32 45, %s13
      %p149 = scmp.lt.s32.totalorder %s148, 89
      %s150 = scalar_select %p149, %s148, 89
      %s151 = smul.addr %s150, 2
      %s152 = smul.addr %s151, 8
      %s153 = scalar_lea.vmem %s2, %s152
      %s154 = smul.u32 45, %s13
      %p155 = scmp.lt.s32.totalorder %s154, 89
      %s156 = scalar_select %p155, %s154, 89
      %s157 = smul.addr %s156, 2
      %s158 = smul.addr %s157, 8
      %s159 = scalar_lea.vmem %s0, %s158
      %s160 = smul.u32 45, %s13
      %s161 = smul.u32 45, %s13
      %p162 = scmp.lt.s32.totalorder %s161, 89
      %s163 = scalar_select %p162, %s161, 89
      %s164 = smul.addr %s163, 8
      %s165 = scalar_lea.vmem %s1, %s164
      %s166 = smul.u32 45, %s13
      %s167 = smul.u32 45, %s13
      %p168 = scmp.lt.s32.totalorder %s167, 89
      %s169 = scalar_select %p168, %s167, 89
      %s170 = smul.addr %s169, 2
      %s171 = smul.addr %s170, 8
      %s172 = scalar_lea.vmem %s2, %s171
      %s173 = smul.u32 45, %s13
      %v174 = vld [vmem:[%s159] sm:$0xff]
      %v175 = vld [vmem:[%s159 + $0x8] sm:$0xff]
      %v176 = vld [vmem:[%s159 + $0x10] sm:$0xff]
      %v177 = vld [vmem:[%s159 + $0x18] sm:$0xff]
      %v178 = vld [vmem:[%s159 + $0x20] sm:$0xff]
      %v179 = vld [vmem:[%s159 + $0x28] sm:$0xff]
      %v180 = vld [vmem:[%s159 + $0x30] sm:$0xff]
      %v181 = vld [vmem:[%s159 + $0x38] sm:$0xff]
      %v182 = vld [vmem:[%s159 + $0x40] sm:$0xff]
      %v183 = vld [vmem:[%s159 + $0x48] sm:$0xff]
      %v184 = vld [vmem:[%s159 + $0x50] sm:$0xff]
      %v185 = vld [vmem:[%s159 + $0x58] sm:$0xff]
      %v186 = vld [vmem:[%s159 + $0x60] sm:$0xff]
      %v187 = vld [vmem:[%s159 + $0x68] sm:$0xff]
      %v188 = vld [vmem:[%s159 + $0x70] sm:$0xff]
      %v189 = vld [vmem:[%s159 + $0x78] sm:$0xff]
      %v190 = vld [vmem:[%s159 + $0x80] sm:$0xff]
      %v191 = vld [vmem:[%s159 + $0x88] sm:$0xff]
      %v192 = vld [vmem:[%s159 + $0x90] sm:$0xff]
      %v193 = vld [vmem:[%s159 + $0x98] sm:$0xff]
      %v194 = vld [vmem:[%s159 + $0xa0] sm:$0xff]
      %v195 = vld [vmem:[%s159 + $0xa8] sm:$0xff]
      %v196 = vld [vmem:[%s159 + $0xb0] sm:$0xff]
      %v197 = vld [vmem:[%s159 + $0xb8] sm:$0xff]
      %v198 = vld [vmem:[%s159 + $0xc0] sm:$0xff]
      %v199 = vld [vmem:[%s159 + $0xc8] sm:$0xff]
      %v200 = vld [vmem:[%s159 + $0xd0] sm:$0xff]
      %v201 = vld [vmem:[%s159 + $0xd8] sm:$0xff]
      %v202 = vld [vmem:[%s159 + $0xe0] sm:$0xff]
      %v203 = vld [vmem:[%s159 + $0xe8] sm:$0xff]
      %v204 = vld [vmem:[%s159 + $0xf0] sm:$0xff]
      %v205 = vld [vmem:[%s159 + $0xf8] sm:$0xff]
      %v206 = vld [vmem:[%s159 + $0x100] sm:$0xff]
      %v207 = vld [vmem:[%s159 + $0x108] sm:$0xff]
      %v208 = vld [vmem:[%s159 + $0x110] sm:$0xff]
      %v209 = vld [vmem:[%s159 + $0x118] sm:$0xff]
      %v210 = vld [vmem:[%s159 + $0x120] sm:$0xff]
      %v211 = vld [vmem:[%s159 + $0x128] sm:$0xff]
      %v212 = vld [vmem:[%s159 + $0x130] sm:$0xff]
      %v213 = vld [vmem:[%s159 + $0x138] sm:$0xff]
      %v214 = vld [vmem:[%s159 + $0x140] sm:$0xff]
      %v215 = vld [vmem:[%s159 + $0x148] sm:$0xff]
      %v216 = vld [vmem:[%s159 + $0x150] sm:$0xff]
      %v217 = vld [vmem:[%s159 + $0x158] sm:$0xff]
      %v218 = vld [vmem:[%s159 + $0x160] sm:$0xff]
      %v219 = vld [vmem:[%s159 + $0x168] sm:$0xff]
      %v220 = vld [vmem:[%s159 + $0x170] sm:$0xff]
      %v221 = vld [vmem:[%s159 + $0x178] sm:$0xff]
      %v222 = vld [vmem:[%s159 + $0x180] sm:$0xff]
      %v223 = vld [vmem:[%s159 + $0x188] sm:$0xff]
      %v224 = vld [vmem:[%s159 + $0x190] sm:$0xff]
      %v225 = vld [vmem:[%s159 + $0x198] sm:$0xff]
      %v226 = vld [vmem:[%s159 + $0x1a0] sm:$0xff]
      %v227 = vld [vmem:[%s159 + $0x1a8] sm:$0xff]
      %v228 = vld [vmem:[%s159 + $0x1b0] sm:$0xff]
      %v229 = vld [vmem:[%s159 + $0x1b8] sm:$0xff]
      %v230 = vld [vmem:[%s159 + $0x1c0] sm:$0xff]
      %v231 = vld [vmem:[%s159 + $0x1c8] sm:$0xff]
      %v232 = vld [vmem:[%s159 + $0x1d0] sm:$0xff]
      %v233 = vld [vmem:[%s159 + $0x1d8] sm:$0xff]
      %v234 = vld [vmem:[%s159 + $0x1e0] sm:$0xff]
      %v235 = vld [vmem:[%s159 + $0x1e8] sm:$0xff]
      %v236 = vld [vmem:[%s159 + $0x1f0] sm:$0xff]
      %v237 = vld [vmem:[%s159 + $0x1f8] sm:$0xff]
      %v238 = vld [vmem:[%s159 + $0x200] sm:$0xff]
      %v239 = vld [vmem:[%s159 + $0x208] sm:$0xff]
      %v240 = vld [vmem:[%s159 + $0x210] sm:$0xff]
      %v241 = vld [vmem:[%s159 + $0x218] sm:$0xff]
      %v242 = vld [vmem:[%s159 + $0x220] sm:$0xff]
      %v243 = vld [vmem:[%s159 + $0x228] sm:$0xff]
      %v244 = vld [vmem:[%s159 + $0x230] sm:$0xff]
      %v245 = vld [vmem:[%s159 + $0x238] sm:$0xff]
      %v246 = vld [vmem:[%s159 + $0x240] sm:$0xff]
      %v247 = vld [vmem:[%s159 + $0x248] sm:$0xff]
      %v248 = vld [vmem:[%s159 + $0x250] sm:$0xff]
      %v249 = vld [vmem:[%s159 + $0x258] sm:$0xff]
      %v250 = vld [vmem:[%s159 + $0x260] sm:$0xff]
      %v251 = vld [vmem:[%s159 + $0x268] sm:$0xff]
      %v252 = vld [vmem:[%s159 + $0x270] sm:$0xff]
      %v253 = vld [vmem:[%s159 + $0x278] sm:$0xff]
      %v254 = vld [vmem:[%s159 + $0x280] sm:$0xff]
      %v255 = vld [vmem:[%s159 + $0x288] sm:$0xff]
      %v256 = vld [vmem:[%s159 + $0x290] sm:$0xff]
      %v257 = vld [vmem:[%s159 + $0x298] sm:$0xff]
      %v258 = vld [vmem:[%s159 + $0x2a0] sm:$0xff]
      %v259 = vld [vmem:[%s159 + $0x2a8] sm:$0xff]
      %v260 = vld [vmem:[%s159 + $0x2b0] sm:$0xff]
      %v261 = vld [vmem:[%s159 + $0x2b8] sm:$0xff]
      %v262 = vld [vmem:[%s159 + $0x2c0] sm:$0xff]
      %v263 = vld [vmem:[%s159 + $0x2c8] sm:$0xff]
      %v264 = vadd.f32 %v174, 0.0
      %v265 = vadd.f32 %v175, 0.0
      %v266 = vadd.f32 %v176, 0.0
      %v267 = vadd.f32 %v177, 0.0
      %v268 = vadd.f32 %v178, 0.0
      %v269 = vadd.f32 %v179, 0.0
      %v270 = vadd.f32 %v180, 0.0
      %v271 = vadd.f32 %v181, 0.0
      %v272 = vadd.f32 %v182, 0.0
      %v273 = vadd.f32 %v183, 0.0
      %v274 = vadd.f32 %v184, 0.0
      %v275 = vadd.f32 %v185, 0.0
      %v276 = vadd.f32 %v186, 0.0
      %v277 = vadd.f32 %v187, 0.0
      %v278 = vadd.f32 %v188, 0.0
      %v279 = vadd.f32 %v189, 0.0
      %v280 = vadd.f32 %v190, 0.0
      %v281 = vadd.f32 %v191, 0.0
      %v282 = vadd.f32 %v192, 0.0
      %v283 = vadd.f32 %v193, 0.0
      %v284 = vadd.f32 %v194, 0.0
      %v285 = vadd.f32 %v195, 0.0
      %v286 = vadd.f32 %v196, 0.0
      %v287 = vadd.f32 %v197, 0.0
      %v288 = vadd.f32 %v198, 0.0
      %v289 = vadd.f32 %v199, 0.0
      %v290 = vadd.f32 %v200, 0.0
      %v291 = vadd.f32 %v201, 0.0
      %v292 = vadd.f32 %v202, 0.0
      %v293 = vadd.f32 %v203, 0.0
      %v294 = vadd.f32 %v204, 0.0
      %v295 = vadd.f32 %v205, 0.0
      %v296 = vadd.f32 %v206, 0.0
      %v297 = vadd.f32 %v207, 0.0
      %v298 = vadd.f32 %v208, 0.0
      %v299 = vadd.f32 %v209, 0.0
      %v300 = vadd.f32 %v210, 0.0
      %v301 = vadd.f32 %v211, 0.0
      %v302 = vadd.f32 %v212, 0.0
      %v303 = vadd.f32 %v213, 0.0
      %v304 = vadd.f32 %v214, 0.0
      %v305 = vadd.f32 %v215, 0.0
      %v306 = vadd.f32 %v216, 0.0
      %v307 = vadd.f32 %v217, 0.0
      %v308 = vadd.f32 %v218, 0.0
      %v309 = vadd.f32 %v219, 0.0
      %v310 = vadd.f32 %v220, 0.0
      %v311 = vadd.f32 %v221, 0.0
      %v312 = vadd.f32 %v222, 0.0
      %v313 = vadd.f32 %v223, 0.0
      %v314 = vadd.f32 %v224, 0.0
      %v315 = vadd.f32 %v225, 0.0
      %v316 = vadd.f32 %v226, 0.0
      %v317 = vadd.f32 %v227, 0.0
      %v318 = vadd.f32 %v228, 0.0
      %v319 = vadd.f32 %v229, 0.0
      %v320 = vadd.f32 %v230, 0.0
      %v321 = vadd.f32 %v231, 0.0
      %v322 = vadd.f32 %v232, 0.0
      %v323 = vadd.f32 %v233, 0.0
      %v324 = vadd.f32 %v234, 0.0
      %v325 = vadd.f32 %v235, 0.0
      %v326 = vadd.f32 %v236, 0.0
      %v327 = vadd.f32 %v237, 0.0
      %v328 = vadd.f32 %v238, 0.0
      %v329 = vadd.f32 %v239, 0.0
      %v330 = vadd.f32 %v240, 0.0
      %v331 = vadd.f32 %v241, 0.0
      %v332 = vadd.f32 %v242, 0.0
      %v333 = vadd.f32 %v243, 0.0
      %v334 = vadd.f32 %v244, 0.0
      %v335 = vadd.f32 %v245, 0.0
      %v336 = vadd.f32 %v246, 0.0
      %v337 = vadd.f32 %v247, 0.0
      %v338 = vadd.f32 %v248, 0.0
      %v339 = vadd.f32 %v249, 0.0
      %v340 = vadd.f32 %v250, 0.0
      %v341 = vadd.f32 %v251, 0.0
      %v342 = vadd.f32 %v252, 0.0
      %v343 = vadd.f32 %v253, 0.0
      %v344 = vadd.f32 %v254, 0.0
      %v345 = vadd.f32 %v255, 0.0
      %v346 = vadd.f32 %v256, 0.0
      %v347 = vadd.f32 %v257, 0.0
      %v348 = vadd.f32 %v258, 0.0
      %v349 = vadd.f32 %v259, 0.0
      %v350 = vadd.f32 %v260, 0.0
      %v351 = vadd.f32 %v261, 0.0
      %v352 = vadd.f32 %v262, 0.0
      %v353 = vadd.f32 %v263, 0.0
      %vm354 = vcmask 556032
      %v355 = vsel %vm354, %v265, 0.0
      %v356 = vadd.f32 %v264, %v355
      %357 = vadd.xlane.f32.xlu0 %v356
      %v358 = vpop.xlane.xlu0 %357
      %v359 = vsel %vm354, %v267, 0.0
      %v360 = vadd.f32 %v266, %v359
      %361 = vadd.xlane.f32.xlu0 %v360
      %v362 = vpop.xlane.xlu0 %361
      %v363 = vsel %vm354, %v269, 0.0
      %v364 = vadd.f32 %v268, %v363
      %365 = vadd.xlane.f32.xlu0 %v364
      %v366 = vpop.xlane.xlu0 %365
      %v367 = vsel %vm354, %v271, 0.0
      %v368 = vadd.f32 %v270, %v367
      %369 = vadd.xlane.f32.xlu0 %v368
      %v370 = vpop.xlane.xlu0 %369
      %v371 = vsel %vm354, %v273, 0.0
      %v372 = vadd.f32 %v272, %v371
      %373 = vadd.xlane.f32.xlu0 %v372
      %v374 = vpop.xlane.xlu0 %373
      %v375 = vsel %vm354, %v275, 0.0
      %v376 = vadd.f32 %v274, %v375
      %377 = vadd.xlane.f32.xlu0 %v376
      %v378 = vpop.xlane.xlu0 %377
      %v379 = vsel %vm354, %v277, 0.0
      %v380 = vadd.f32 %v276, %v379
      %381 = vadd.xlane.f32.xlu0 %v380
      %v382 = vpop.xlane.xlu0 %381
      %v383 = vsel %vm354, %v279, 0.0
      %v384 = vadd.f32 %v278, %v383
      %385 = vadd.xlane.f32.xlu0 %v384
      %v386 = vpop.xlane.xlu0 %385
      %v387 = vsel %vm354, %v281, 0.0
      %v388 = vadd.f32 %v280, %v387
      %389 = vadd.xlane.f32.xlu0 %v388
      %v390 = vpop.xlane.xlu0 %389
      %v391 = vsel %vm354, %v283, 0.0
      %v392 = vadd.f32 %v282, %v391
      %393 = vadd.xlane.f32.xlu0 %v392
      %v394 = vpop.xlane.xlu0 %393
      %v395 = vsel %vm354, %v285, 0.0
      %v396 = vadd.f32 %v284, %v395
      %397 = vadd.xlane.f32.xlu0 %v396
      %v398 = vpop.xlane.xlu0 %397
      %v399 = vsel %vm354, %v287, 0.0
      %v400 = vadd.f32 %v286, %v399
      %401 = vadd.xlane.f32.xlu0 %v400
      %v402 = vpop.xlane.xlu0 %401
      %v403 = vsel %vm354, %v289, 0.0
      %v404 = vadd.f32 %v288, %v403
      %405 = vadd.xlane.f32.xlu0 %v404
      %v406 = vpop.xlane.xlu0 %405
      %v407 = vsel %vm354, %v291, 0.0
      %v408 = vadd.f32 %v290, %v407
      %409 = vadd.xlane.f32.xlu0 %v408
      %v410 = vpop.xlane.xlu0 %409
      %v411 = vsel %vm354, %v293, 0.0
      %v412 = vadd.f32 %v292, %v411
      %413 = vadd.xlane.f32.xlu0 %v412
      %v414 = vpop.xlane.xlu0 %413
      %v415 = vsel %vm354, %v295, 0.0
      %v416 = vadd.f32 %v294, %v415
      %417 = vadd.xlane.f32.xlu0 %v416
      %v418 = vpop.xlane.xlu0 %417
      %v419 = vsel %vm354, %v297, 0.0
      %v420 = vadd.f32 %v296, %v419
      %421 = vadd.xlane.f32.xlu0 %v420
      %v422 = vpop.xlane.xlu0 %421
      %v423 = vsel %vm354, %v299, 0.0
      %v424 = vadd.f32 %v298, %v423
      %425 = vadd.xlane.f32.xlu0 %v424
      %v426 = vpop.xlane.xlu0 %425
      %v427 = vsel %vm354, %v301, 0.0
      %v428 = vadd.f32 %v300, %v427
      %429 = vadd.xlane.f32.xlu0 %v428
      %v430 = vpop.xlane.xlu0 %429
      %v431 = vsel %vm354, %v303, 0.0
      %v432 = vadd.f32 %v302, %v431
      %433 = vadd.xlane.f32.xlu0 %v432
      %v434 = vpop.xlane.xlu0 %433
      %v435 = vsel %vm354, %v305, 0.0
      %v436 = vadd.f32 %v304, %v435
      %437 = vadd.xlane.f32.xlu0 %v436
      %v438 = vpop.xlane.xlu0 %437
      %v439 = vsel %vm354, %v307, 0.0
      %v440 = vadd.f32 %v306, %v439
      %441 = vadd.xlane.f32.xlu0 %v440
      %v442 = vpop.xlane.xlu0 %441
      %v443 = vsel %vm354, %v309, 0.0
      %v444 = vadd.f32 %v308, %v443
      %445 = vadd.xlane.f32.xlu0 %v444
      %v446 = vpop.xlane.xlu0 %445
      %v447 = vsel %vm354, %v311, 0.0
      %v448 = vadd.f32 %v310, %v447
      %449 = vadd.xlane.f32.xlu0 %v448
      %v450 = vpop.xlane.xlu0 %449
      %v451 = vsel %vm354, %v313, 0.0
      %v452 = vadd.f32 %v312, %v451
      %453 = vadd.xlane.f32.xlu0 %v452
      %v454 = vpop.xlane.xlu0 %453
      %v455 = vsel %vm354, %v315, 0.0
      %v456 = vadd.f32 %v314, %v455
      %457 = vadd.xlane.f32.xlu0 %v456
      %v458 = vpop.xlane.xlu0 %457
      %v459 = vsel %vm354, %v317, 0.0
      %v460 = vadd.f32 %v316, %v459
      %461 = vadd.xlane.f32.xlu0 %v460
      %v462 = vpop.xlane.xlu0 %461
      %v463 = vsel %vm354, %v319, 0.0
      %v464 = vadd.f32 %v318, %v463
      %465 = vadd.xlane.f32.xlu0 %v464
      %v466 = vpop.xlane.xlu0 %465
      %v467 = vsel %vm354, %v321, 0.0
      %v468 = vadd.f32 %v320, %v467
      %469 = vadd.xlane.f32.xlu0 %v468
      %v470 = vpop.xlane.xlu0 %469
      %v471 = vsel %vm354, %v323, 0.0
      %v472 = vadd.f32 %v322, %v471
      %473 = vadd.xlane.f32.xlu0 %v472
      %v474 = vpop.xlane.xlu0 %473
      %v475 = vsel %vm354, %v325, 0.0
      %v476 = vadd.f32 %v324, %v475
      %477 = vadd.xlane.f32.xlu0 %v476
      %v478 = vpop.xlane.xlu0 %477
      %v479 = vsel %vm354, %v327, 0.0
      %v480 = vadd.f32 %v326, %v479
      %481 = vadd.xlane.f32.xlu0 %v480
      %v482 = vpop.xlane.xlu0 %481
      %v483 = vsel %vm354, %v329, 0.0
      %v484 = vadd.f32 %v328, %v483
      %485 = vadd.xlane.f32.xlu0 %v484
      %v486 = vpop.xlane.xlu0 %485
      %v487 = vsel %vm354, %v331, 0.0
      %v488 = vadd.f32 %v330, %v487
      %489 = vadd.xlane.f32.xlu0 %v488
      %v490 = vpop.xlane.xlu0 %489
      %v491 = vsel %vm354, %v333, 0.0
      %v492 = vadd.f32 %v332, %v491
      %493 = vadd.xlane.f32.xlu0 %v492
      %v494 = vpop.xlane.xlu0 %493
      %v495 = vsel %vm354, %v335, 0.0
      %v496 = vadd.f32 %v334, %v495
      %497 = vadd.xlane.f32.xlu0 %v496
      %v498 = vpop.xlane.xlu0 %497
      %v499 = vsel %vm354, %v337, 0.0
      %v500 = vadd.f32 %v336, %v499
      %501 = vadd.xlane.f32.xlu0 %v500
      %v502 = vpop.xlane.xlu0 %501
      %v503 = vsel %vm354, %v339, 0.0
      %v504 = vadd.f32 %v338, %v503
      %505 = vadd.xlane.f32.xlu0 %v504
      %v506 = vpop.xlane.xlu0 %505
      %v507 = vsel %vm354, %v341, 0.0
      %v508 = vadd.f32 %v340, %v507
      %509 = vadd.xlane.f32.xlu0 %v508
      %v510 = vpop.xlane.xlu0 %509
      %v511 = vsel %vm354, %v343, 0.0
      %v512 = vadd.f32 %v342, %v511
      %513 = vadd.xlane.f32.xlu0 %v512
      %v514 = vpop.xlane.xlu0 %513
      %v515 = vsel %vm354, %v345, 0.0
      %v516 = vadd.f32 %v344, %v515
      %517 = vadd.xlane.f32.xlu0 %v516
      %v518 = vpop.xlane.xlu0 %517
      %v519 = vsel %vm354, %v347, 0.0
      %v520 = vadd.f32 %v346, %v519
      %521 = vadd.xlane.f32.xlu0 %v520
      %v522 = vpop.xlane.xlu0 %521
      %v523 = vsel %vm354, %v349, 0.0
      %v524 = vadd.f32 %v348, %v523
      %525 = vadd.xlane.f32.xlu0 %v524
      %v526 = vpop.xlane.xlu0 %525
      %v527 = vsel %vm354, %v351, 0.0
      %v528 = vadd.f32 %v350, %v527
      %529 = vadd.xlane.f32.xlu0 %v528
      %v530 = vpop.xlane.xlu0 %529
      %v531 = vsel %vm354, %v353, 0.0
      %v532 = vadd.f32 %v352, %v531
      %533 = vadd.xlane.f32.xlu0 %v532
      %v534 = vpop.xlane.xlu0 %533
      %v535 = vmul.f32 %v358, 0.0051020407
      %v536 = vmul.f32 %v362, 0.0051020407
      %v537 = vmul.f32 %v366, 0.0051020407
      %v538 = vmul.f32 %v370, 0.0051020407
      %v539 = vmul.f32 %v374, 0.0051020407
      %v540 = vmul.f32 %v378, 0.0051020407
      %v541 = vmul.f32 %v382, 0.0051020407
      %v542 = vmul.f32 %v386, 0.0051020407
      %v543 = vmul.f32 %v390, 0.0051020407
      %v544 = vmul.f32 %v394, 0.0051020407
      %v545 = vmul.f32 %v398, 0.0051020407
      %v546 = vmul.f32 %v402, 0.0051020407
      %v547 = vmul.f32 %v406, 0.0051020407
      %v548 = vmul.f32 %v410, 0.0051020407
      %v549 = vmul.f32 %v414, 0.0051020407
      %v550 = vmul.f32 %v418, 0.0051020407
      %v551 = vmul.f32 %v422, 0.0051020407
      %v552 = vmul.f32 %v426, 0.0051020407
      %v553 = vmul.f32 %v430, 0.0051020407
      %v554 = vmul.f32 %v434, 0.0051020407
      %v555 = vmul.f32 %v438, 0.0051020407
      %v556 = vmul.f32 %v442, 0.0051020407
      %v557 = vmul.f32 %v446, 0.0051020407
      %v558 = vmul.f32 %v450, 0.0051020407
      %v559 = vmul.f32 %v454, 0.0051020407
      %v560 = vmul.f32 %v458, 0.0051020407
      %v561 = vmul.f32 %v462, 0.0051020407
      %v562 = vmul.f32 %v466, 0.0051020407
      %v563 = vmul.f32 %v470, 0.0051020407
      %v564 = vmul.f32 %v474, 0.0051020407
      %v565 = vmul.f32 %v478, 0.0051020407
      %v566 = vmul.f32 %v482, 0.0051020407
      %v567 = vmul.f32 %v486, 0.0051020407
      %v568 = vmul.f32 %v490, 0.0051020407
      %v569 = vmul.f32 %v494, 0.0051020407
      %v570 = vmul.f32 %v498, 0.0051020407
      %v571 = vmul.f32 %v502, 0.0051020407
      %v572 = vmul.f32 %v506, 0.0051020407
      %v573 = vmul.f32 %v510, 0.0051020407
      %v574 = vmul.f32 %v514, 0.0051020407
      %v575 = vmul.f32 %v518, 0.0051020407
      %v576 = vmul.f32 %v522, 0.0051020407
      %v577 = vmul.f32 %v526, 0.0051020407
      %v578 = vmul.f32 %v530, 0.0051020407
      %v579 = vmul.f32 %v534, 0.0051020407
      %v580 = vsub.f32 %v174, %v535
      %v581 = vsub.f32 %v175, %v535
      %v582 = vsub.f32 %v176, %v536
      %v583 = vsub.f32 %v177, %v536
      %v584 = vsub.f32 %v178, %v537
      %v585 = vsub.f32 %v179, %v537
      %v586 = vsub.f32 %v180, %v538
      %v587 = vsub.f32 %v181, %v538
      %v588 = vsub.f32 %v182, %v539
      %v589 = vsub.f32 %v183, %v539
      %v590 = vsub.f32 %v184, %v540
      %v591 = vsub.f32 %v185, %v540
      %v592 = vsub.f32 %v186, %v541
      %v593 = vsub.f32 %v187, %v541
      %v594 = vsub.f32 %v188, %v542
      %v595 = vsub.f32 %v189, %v542
      %v596 = vsub.f32 %v190, %v543
      %v597 = vsub.f32 %v191, %v543
      %v598 = vsub.f32 %v192, %v544
      %v599 = vsub.f32 %v193, %v544
      %v600 = vsub.f32 %v194, %v545
      %v601 = vsub.f32 %v195, %v545
      %v602 = vsub.f32 %v196, %v546
      %v603 = vsub.f32 %v197, %v546
      %v604 = vsub.f32 %v198, %v547
      %v605 = vsub.f32 %v199, %v547
      %v606 = vsub.f32 %v200, %v548
      %v607 = vsub.f32 %v201, %v548
      %v608 = vsub.f32 %v202, %v549
      %v609 = vsub.f32 %v203, %v549
      %v610 = vsub.f32 %v204, %v550
      %v611 = vsub.f32 %v205, %v550
      %v612 = vsub.f32 %v206, %v551
      %v613 = vsub.f32 %v207, %v551
      %v614 = vsub.f32 %v208, %v552
      %v615 = vsub.f32 %v209, %v552
      %v616 = vsub.f32 %v210, %v553
      %v617 = vsub.f32 %v211, %v553
      %v618 = vsub.f32 %v212, %v554
      %v619 = vsub.f32 %v213, %v554
      %v620 = vsub.f32 %v214, %v555
      %v621 = vsub.f32 %v215, %v555
      %v622 = vsub.f32 %v216, %v556
      %v623 = vsub.f32 %v217, %v556
      %v624 = vsub.f32 %v218, %v557
      %v625 = vsub.f32 %v219, %v557
      %v626 = vsub.f32 %v220, %v558
      %v627 = vsub.f32 %v221, %v558
      %v628 = vsub.f32 %v222, %v559
      %v629 = vsub.f32 %v223, %v559
      %v630 = vsub.f32 %v224, %v560
      %v631 = vsub.f32 %v225, %v560
      %v632 = vsub.f32 %v226, %v561
      %v633 = vsub.f32 %v227, %v561
      %v634 = vsub.f32 %v228, %v562
      %v635 = vsub.f32 %v229, %v562
      %v636 = vsub.f32 %v230, %v563
      %v637 = vsub.f32 %v231, %v563
      %v638 = vsub.f32 %v232, %v564
      %v639 = vsub.f32 %v233, %v564
      %v640 = vsub.f32 %v234, %v565
      %v641 = vsub.f32 %v235, %v565
      %v642 = vsub.f32 %v236, %v566
      %v643 = vsub.f32 %v237, %v566
      %v644 = vsub.f32 %v238, %v567
      %v645 = vsub.f32 %v239, %v567
      %v646 = vsub.f32 %v240, %v568
      %v647 = vsub.f32 %v241, %v568
      %v648 = vsub.f32 %v242, %v569
      %v649 = vsub.f32 %v243, %v569
      %v650 = vsub.f32 %v244, %v570
      %v651 = vsub.f32 %v245, %v570
      %v652 = vsub.f32 %v246, %v571
      %v653 = vsub.f32 %v247, %v571
      %v654 = vsub.f32 %v248, %v572
      %v655 = vsub.f32 %v249, %v572
      %v656 = vsub.f32 %v250, %v573
      %v657 = vsub.f32 %v251, %v573
      %v658 = vsub.f32 %v252, %v574
      %v659 = vsub.f32 %v253, %v574
      %v660 = vsub.f32 %v254, %v575
      %v661 = vsub.f32 %v255, %v575
      %v662 = vsub.f32 %v256, %v576
      %v663 = vsub.f32 %v257, %v576
      %v664 = vsub.f32 %v258, %v577
      %v665 = vsub.f32 %v259, %v577
      %v666 = vsub.f32 %v260, %v578
      %v667 = vsub.f32 %v261, %v578
      %v668 = vsub.f32 %v262, %v579
      %v669 = vsub.f32 %v263, %v579
      %v670 = vmul.f32 %v580, %v580
      %v671 = vmul.f32 %v581, %v581
      %v672 = vmul.f32 %v582, %v582
      %v673 = vmul.f32 %v583, %v583
      %v674 = vmul.f32 %v584, %v584
      %v675 = vmul.f32 %v585, %v585
      %v676 = vmul.f32 %v586, %v586
      %v677 = vmul.f32 %v587, %v587
      %v678 = vmul.f32 %v588, %v588
      %v679 = vmul.f32 %v589, %v589
      %v680 = vmul.f32 %v590, %v590
      %v681 = vmul.f32 %v591, %v591
      %v682 = vmul.f32 %v592, %v592
      %v683 = vmul.f32 %v593, %v593
      %v684 = vmul.f32 %v594, %v594
      %v685 = vmul.f32 %v595, %v595
      %v686 = vmul.f32 %v596, %v596
      %v687 = vmul.f32 %v597, %v597
      %v688 = vmul.f32 %v598, %v598
      %v689 = vmul.f32 %v599, %v599
      %v690 = vmul.f32 %v600, %v600
      %v691 = vmul.f32 %v601, %v601
      %v692 = vmul.f32 %v602, %v602
      %v693 = vmul.f32 %v603, %v603
      %v694 = vmul.f32 %v604, %v604
      %v695 = vmul.f32 %v605, %v605
      %v696 = vmul.f32 %v606, %v606
      %v697 = vmul.f32 %v607, %v607
      %v698 = vmul.f32 %v608, %v608
      %v699 = vmul.f32 %v609, %v609
      %v700 = vmul.f32 %v610, %v610
      %v701 = vmul.f32 %v611, %v611
      %v702 = vmul.f32 %v612, %v612
      %v703 = vmul.f32 %v613, %v613
      %v704 = vmul.f32 %v614, %v614
      %v705 = vmul.f32 %v615, %v615
      %v706 = vmul.f32 %v616, %v616
      %v707 = vmul.f32 %v617, %v617
      %v708 = vmul.f32 %v618, %v618
      %v709 = vmul.f32 %v619, %v619
      %v710 = vmul.f32 %v620, %v620
      %v711 = vmul.f32 %v621, %v621
      %v712 = vmul.f32 %v622, %v622
      %v713 = vmul.f32 %v623, %v623
      %v714 = vmul.f32 %v624, %v624
      %v715 = vmul.f32 %v625, %v625
      %v716 = vmul.f32 %v626, %v626
      %v717 = vmul.f32 %v627, %v627
      %v718 = vmul.f32 %v628, %v628
      %v719 = vmul.f32 %v629, %v629
      %v720 = vmul.f32 %v630, %v630
      %v721 = vmul.f32 %v631, %v631
      %v722 = vmul.f32 %v632, %v632
      %v723 = vmul.f32 %v633, %v633
      %v724 = vmul.f32 %v634, %v634
      %v725 = vmul.f32 %v635, %v635
      %v726 = vmul.f32 %v636, %v636
      %v727 = vmul.f32 %v637, %v637
      %v728 = vmul.f32 %v638, %v638
      %v729 = vmul.f32 %v639, %v639
      %v730 = vmul.f32 %v640, %v640
      %v731 = vmul.f32 %v641, %v641
      %v732 = vmul.f32 %v642, %v642
      %v733 = vmul.f32 %v643, %v643
      %v734 = vmul.f32 %v644, %v644
      %v735 = vmul.f32 %v645, %v645
      %v736 = vmul.f32 %v646, %v646
      %v737 = vmul.f32 %v647, %v647
      %v738 = vmul.f32 %v648, %v648
      %v739 = vmul.f32 %v649, %v649
      %v740 = vmul.f32 %v650, %v650
      %v741 = vmul.f32 %v651, %v651
      %v742 = vmul.f32 %v652, %v652
      %v743 = vmul.f32 %v653, %v653
      %v744 = vmul.f32 %v654, %v654
      %v745 = vmul.f32 %v655, %v655
      %v746 = vmul.f32 %v656, %v656
      %v747 = vmul.f32 %v657, %v657
      %v748 = vmul.f32 %v658, %v658
      %v749 = vmul.f32 %v659, %v659
      %v750 = vmul.f32 %v660, %v660
      %v751 = vmul.f32 %v661, %v661
      %v752 = vmul.f32 %v662, %v662
      %v753 = vmul.f32 %v663, %v663
      %v754 = vmul.f32 %v664, %v664
      %v755 = vmul.f32 %v665, %v665
      %v756 = vmul.f32 %v666, %v666
      %v757 = vmul.f32 %v667, %v667
      %v758 = vmul.f32 %v668, %v668
      %v759 = vmul.f32 %v669, %v669
      %v760 = vadd.f32 %v670, 0.0
      %v761 = vadd.f32 %v671, 0.0
      %v762 = vadd.f32 %v672, 0.0
      %v763 = vadd.f32 %v673, 0.0
      %v764 = vadd.f32 %v674, 0.0
      %v765 = vadd.f32 %v675, 0.0
      %v766 = vadd.f32 %v676, 0.0
      %v767 = vadd.f32 %v677, 0.0
      %v768 = vadd.f32 %v678, 0.0
      %v769 = vadd.f32 %v679, 0.0
      %v770 = vadd.f32 %v680, 0.0
      %v771 = vadd.f32 %v681, 0.0
      %v772 = vadd.f32 %v682, 0.0
      %v773 = vadd.f32 %v683, 0.0
      %v774 = vadd.f32 %v684, 0.0
      %v775 = vadd.f32 %v685, 0.0
      %v776 = vadd.f32 %v686, 0.0
      %v777 = vadd.f32 %v687, 0.0
      %v778 = vadd.f32 %v688, 0.0
      %v779 = vadd.f32 %v689, 0.0
      %v780 = vadd.f32 %v690, 0.0
      %v781 = vadd.f32 %v691, 0.0
      %v782 = vadd.f32 %v692, 0.0
      %v783 = vadd.f32 %v693, 0.0
      %v784 = vadd.f32 %v694, 0.0
      %v785 = vadd.f32 %v695, 0.0
      %v786 = vadd.f32 %v696, 0.0
      %v787 = vadd.f32 %v697, 0.0
      %v788 = vadd.f32 %v698, 0.0
      %v789 = vadd.f32 %v699, 0.0
      %v790 = vadd.f32 %v700, 0.0
      %v791 = vadd.f32 %v701, 0.0
      %v792 = vadd.f32 %v702, 0.0
      %v793 = vadd.f32 %v703, 0.0
      %v794 = vadd.f32 %v704, 0.0
      %v795 = vadd.f32 %v705, 0.0
      %v796 = vadd.f32 %v706, 0.0
      %v797 = vadd.f32 %v707, 0.0
      %v798 = vadd.f32 %v708, 0.0
      %v799 = vadd.f32 %v709, 0.0
      %v800 = vadd.f32 %v710, 0.0
      %v801 = vadd.f32 %v711, 0.0
      %v802 = vadd.f32 %v712, 0.0
      %v803 = vadd.f32 %v713, 0.0
      %v804 = vadd.f32 %v714, 0.0
      %v805 = vadd.f32 %v715, 0.0
      %v806 = vadd.f32 %v716, 0.0
      %v807 = vadd.f32 %v717, 0.0
      %v808 = vadd.f32 %v718, 0.0
      %v809 = vadd.f32 %v719, 0.0
      %v810 = vadd.f32 %v720, 0.0
      %v811 = vadd.f32 %v721, 0.0
      %v812 = vadd.f32 %v722, 0.0
      %v813 = vadd.f32 %v723, 0.0
      %v814 = vadd.f32 %v724, 0.0
      %v815 = vadd.f32 %v725, 0.0
      %v816 = vadd.f32 %v726, 0.0
      %v817 = vadd.f32 %v727, 0.0
      %v818 = vadd.f32 %v728, 0.0
      %v819 = vadd.f32 %v729, 0.0
      %v820 = vadd.f32 %v730, 0.0
      %v821 = vadd.f32 %v731, 0.0
      %v822 = vadd.f32 %v732, 0.0
      %v823 = vadd.f32 %v733, 0.0
      %v824 = vadd.f32 %v734, 0.0
      %v825 = vadd.f32 %v735, 0.0
      %v826 = vadd.f32 %v736, 0.0
      %v827 = vadd.f32 %v737, 0.0
      %v828 = vadd.f32 %v738, 0.0
      %v829 = vadd.f32 %v739, 0.0
      %v830 = vadd.f32 %v740, 0.0
      %v831 = vadd.f32 %v741, 0.0
      %v832 = vadd.f32 %v742, 0.0
      %v833 = vadd.f32 %v743, 0.0
      %v834 = vadd.f32 %v744, 0.0
      %v835 = vadd.f32 %v745, 0.0
      %v836 = vadd.f32 %v746, 0.0
      %v837 = vadd.f32 %v747, 0.0
      %v838 = vadd.f32 %v748, 0.0
      %v839 = vadd.f32 %v749, 0.0
      %v840 = vadd.f32 %v750, 0.0
      %v841 = vadd.f32 %v751, 0.0
      %v842 = vadd.f32 %v752, 0.0
      %v843 = vadd.f32 %v753, 0.0
      %v844 = vadd.f32 %v754, 0.0
      %v845 = vadd.f32 %v755, 0.0
      %v846 = vadd.f32 %v756, 0.0
      %v847 = vadd.f32 %v757, 0.0
      %v848 = vadd.f32 %v758, 0.0
      %v849 = vadd.f32 %v759, 0.0
      %v850 = vsel %vm354, %v761, 0.0
      %v851 = vadd.f32 %v760, %v850
      %852 = vadd.xlane.f32.xlu0 %v851
      %v853 = vpop.xlane.xlu0 %852
      %v854 = vsel %vm354, %v763, 0.0
      %v855 = vadd.f32 %v762, %v854
      %856 = vadd.xlane.f32.xlu0 %v855
      %v857 = vpop.xlane.xlu0 %856
      %v858 = vsel %vm354, %v765, 0.0
      %v859 = vadd.f32 %v764, %v858
      %860 = vadd.xlane.f32.xlu0 %v859
      %v861 = vpop.xlane.xlu0 %860
      %v862 = vsel %vm354, %v767, 0.0
      %v863 = vadd.f32 %v766, %v862
      %864 = vadd.xlane.f32.xlu0 %v863
      %v865 = vpop.xlane.xlu0 %864
      %v866 = vsel %vm354, %v769, 0.0
      %v867 = vadd.f32 %v768, %v866
      %868 = vadd.xlane.f32.xlu0 %v867
      %v869 = vpop.xlane.xlu0 %868
      %v870 = vsel %vm354, %v771, 0.0
      %v871 = vadd.f32 %v770, %v870
      %872 = vadd.xlane.f32.xlu0 %v871
      %v873 = vpop.xlane.xlu0 %872
      %v874 = vsel %vm354, %v773, 0.0
      %v875 = vadd.f32 %v772, %v874
      %876 = vadd.xlane.f32.xlu0 %v875
      %v877 = vpop.xlane.xlu0 %876
      %v878 = vsel %vm354, %v775, 0.0
      %v879 = vadd.f32 %v774, %v878
      %880 = vadd.xlane.f32.xlu0 %v879
      %v881 = vpop.xlane.xlu0 %880
      %v882 = vsel %vm354, %v777, 0.0
      %v883 = vadd.f32 %v776, %v882
      %884 = vadd.xlane.f32.xlu0 %v883
      %v885 = vpop.xlane.xlu0 %884
      %v886 = vsel %vm354, %v779, 0.0
      %v887 = vadd.f32 %v778, %v886
      %888 = vadd.xlane.f32.xlu0 %v887
      %v889 = vpop.xlane.xlu0 %888
      %v890 = vsel %vm354, %v781, 0.0
      %v891 = vadd.f32 %v780, %v890
      %892 = vadd.xlane.f32.xlu0 %v891
      %v893 = vpop.xlane.xlu0 %892
      %v894 = vsel %vm354, %v783, 0.0
      %v895 = vadd.f32 %v782, %v894
      %896 = vadd.xlane.f32.xlu0 %v895
      %v897 = vpop.xlane.xlu0 %896
      %v898 = vsel %vm354, %v785, 0.0
      %v899 = vadd.f32 %v784, %v898
      %900 = vadd.xlane.f32.xlu0 %v899
      %v901 = vpop.xlane.xlu0 %900
      %v902 = vsel %vm354, %v787, 0.0
      %v903 = vadd.f32 %v786, %v902
      %904 = vadd.xlane.f32.xlu0 %v903
      %v905 = vpop.xlane.xlu0 %904
      %v906 = vsel %vm354, %v789, 0.0
      %v907 = vadd.f32 %v788, %v906
      %908 = vadd.xlane.f32.xlu0 %v907
      %v909 = vpop.xlane.xlu0 %908
      %v910 = vsel %vm354, %v791, 0.0
      %v911 = vadd.f32 %v790, %v910
      %912 = vadd.xlane.f32.xlu0 %v911
      %v913 = vpop.xlane.xlu0 %912
      %v914 = vsel %vm354, %v793, 0.0
      %v915 = vadd.f32 %v792, %v914
      %916 = vadd.xlane.f32.xlu0 %v915
      %v917 = vpop.xlane.xlu0 %916
      %v918 = vsel %vm354, %v795, 0.0
      %v919 = vadd.f32 %v794, %v918
      %920 = vadd.xlane.f32.xlu0 %v919
      %v921 = vpop.xlane.xlu0 %920
      %v922 = vsel %vm354, %v797, 0.0
      %v923 = vadd.f32 %v796, %v922
      %924 = vadd.xlane.f32.xlu0 %v923
      %v925 = vpop.xlane.xlu0 %924
      %v926 = vsel %vm354, %v799, 0.0
      %v927 = vadd.f32 %v798, %v926
      %928 = vadd.xlane.f32.xlu0 %v927
      %v929 = vpop.xlane.xlu0 %928
      %v930 = vsel %vm354, %v801, 0.0
      %v931 = vadd.f32 %v800, %v930
      %932 = vadd.xlane.f32.xlu0 %v931
      %v933 = vpop.xlane.xlu0 %932
      %v934 = vsel %vm354, %v803, 0.0
      %v935 = vadd.f32 %v802, %v934
      %936 = vadd.xlane.f32.xlu0 %v935
      %v937 = vpop.xlane.xlu0 %936
      %v938 = vsel %vm354, %v805, 0.0
      %v939 = vadd.f32 %v804, %v938
      %940 = vadd.xlane.f32.xlu0 %v939
      %v941 = vpop.xlane.xlu0 %940
      %v942 = vsel %vm354, %v807, 0.0
      %v943 = vadd.f32 %v806, %v942
      %944 = vadd.xlane.f32.xlu0 %v943
      %v945 = vpop.xlane.xlu0 %944
      %v946 = vsel %vm354, %v809, 0.0
      %v947 = vadd.f32 %v808, %v946
      %948 = vadd.xlane.f32.xlu0 %v947
      %v949 = vpop.xlane.xlu0 %948
      %v950 = vsel %vm354, %v811, 0.0
      %v951 = vadd.f32 %v810, %v950
      %952 = vadd.xlane.f32.xlu0 %v951
      %v953 = vpop.xlane.xlu0 %952
      %v954 = vsel %vm354, %v813, 0.0
      %v955 = vadd.f32 %v812, %v954
      %956 = vadd.xlane.f32.xlu0 %v955
      %v957 = vpop.xlane.xlu0 %956
      %v958 = vsel %vm354, %v815, 0.0
      %v959 = vadd.f32 %v814, %v958
      %960 = vadd.xlane.f32.xlu0 %v959
      %v961 = vpop.xlane.xlu0 %960
      %v962 = vsel %vm354, %v817, 0.0
      %v963 = vadd.f32 %v816, %v962
      %964 = vadd.xlane.f32.xlu0 %v963
      %v965 = vpop.xlane.xlu0 %964
      %v966 = vsel %vm354, %v819, 0.0
      %v967 = vadd.f32 %v818, %v966
      %968 = vadd.xlane.f32.xlu0 %v967
      %v969 = vpop.xlane.xlu0 %968
      %v970 = vsel %vm354, %v821, 0.0
      %v971 = vadd.f32 %v820, %v970
      %972 = vadd.xlane.f32.xlu0 %v971
      %v973 = vpop.xlane.xlu0 %972
      %v974 = vsel %vm354, %v823, 0.0
      %v975 = vadd.f32 %v822, %v974
      %976 = vadd.xlane.f32.xlu0 %v975
      %v977 = vpop.xlane.xlu0 %976
      %v978 = vsel %vm354, %v825, 0.0
      %v979 = vadd.f32 %v824, %v978
      %980 = vadd.xlane.f32.xlu0 %v979
      %v981 = vpop.xlane.xlu0 %980
      %v982 = vsel %vm354, %v827, 0.0
      %v983 = vadd.f32 %v826, %v982
      %984 = vadd.xlane.f32.xlu0 %v983
      %v985 = vpop.xlane.xlu0 %984
      %v986 = vsel %vm354, %v829, 0.0
      %v987 = vadd.f32 %v828, %v986
      %988 = vadd.xlane.f32.xlu0 %v987
      %v989 = vpop.xlane.xlu0 %988
      %v990 = vsel %vm354, %v831, 0.0
      %v991 = vadd.f32 %v830, %v990
      %992 = vadd.xlane.f32.xlu0 %v991
      %v993 = vpop.xlane.xlu0 %992
      %v994 = vsel %vm354, %v833, 0.0
      %v995 = vadd.f32 %v832, %v994
      %996 = vadd.xlane.f32.xlu0 %v995
      %v997 = vpop.xlane.xlu0 %996
      %v998 = vsel %vm354, %v835, 0.0
      %v999 = vadd.f32 %v834, %v998
      %1000 = vadd.xlane.f32.xlu0 %v999
      %v1001 = vpop.xlane.xlu0 %1000
      %v1002 = vsel %vm354, %v837, 0.0
      %v1003 = vadd.f32 %v836, %v1002
      %1004 = vadd.xlane.f32.xlu0 %v1003
      %v1005 = vpop.xlane.xlu0 %1004
      %v1006 = vsel %vm354, %v839, 0.0
      %v1007 = vadd.f32 %v838, %v1006
      %1008 = vadd.xlane.f32.xlu0 %v1007
      %v1009 = vpop.xlane.xlu0 %1008
      %v1010 = vsel %vm354, %v841, 0.0
      %v1011 = vadd.f32 %v840, %v1010
      %1012 = vadd.xlane.f32.xlu0 %v1011
      %v1013 = vpop.xlane.xlu0 %1012
      %v1014 = vsel %vm354, %v843, 0.0
      %v1015 = vadd.f32 %v842, %v1014
      %1016 = vadd.xlane.f32.xlu0 %v1015
      %v1017 = vpop.xlane.xlu0 %1016
      %v1018 = vsel %vm354, %v845, 0.0
      %v1019 = vadd.f32 %v844, %v1018
      %1020 = vadd.xlane.f32.xlu0 %v1019
      %v1021 = vpop.xlane.xlu0 %1020
      %v1022 = vsel %vm354, %v847, 0.0
      %v1023 = vadd.f32 %v846, %v1022
      %1024 = vadd.xlane.f32.xlu0 %v1023
      %v1025 = vpop.xlane.xlu0 %1024
      %v1026 = vsel %vm354, %v849, 0.0
      %v1027 = vadd.f32 %v848, %v1026
      %1028 = vadd.xlane.f32.xlu0 %v1027
      %v1029 = vpop.xlane.xlu0 %1028
      %v1030 = vmul.f32 %v853, 0.0051020407
      %v1031 = vmul.f32 %v857, 0.0051020407
      %v1032 = vmul.f32 %v861, 0.0051020407
      %v1033 = vmul.f32 %v865, 0.0051020407
      %v1034 = vmul.f32 %v869, 0.0051020407
      %v1035 = vmul.f32 %v873, 0.0051020407
      %v1036 = vmul.f32 %v877, 0.0051020407
      %v1037 = vmul.f32 %v881, 0.0051020407
      %v1038 = vmul.f32 %v885, 0.0051020407
      %v1039 = vmul.f32 %v889, 0.0051020407
      %v1040 = vmul.f32 %v893, 0.0051020407
      %v1041 = vmul.f32 %v897, 0.0051020407
      %v1042 = vmul.f32 %v901, 0.0051020407
      %v1043 = vmul.f32 %v905, 0.0051020407
      %v1044 = vmul.f32 %v909, 0.0051020407
      %v1045 = vmul.f32 %v913, 0.0051020407
      %v1046 = vmul.f32 %v917, 0.0051020407
      %v1047 = vmul.f32 %v921, 0.0051020407
      %v1048 = vmul.f32 %v925, 0.0051020407
      %v1049 = vmul.f32 %v929, 0.0051020407
      %v1050 = vmul.f32 %v933, 0.0051020407
      %v1051 = vmul.f32 %v937, 0.0051020407
      %v1052 = vmul.f32 %v941, 0.0051020407
      %v1053 = vmul.f32 %v945, 0.0051020407
      %v1054 = vmul.f32 %v949, 0.0051020407
      %v1055 = vmul.f32 %v953, 0.0051020407
      %v1056 = vmul.f32 %v957, 0.0051020407
      %v1057 = vmul.f32 %v961, 0.0051020407
      %v1058 = vmul.f32 %v965, 0.0051020407
      %v1059 = vmul.f32 %v969, 0.0051020407
      %v1060 = vmul.f32 %v973, 0.0051020407
      %v1061 = vmul.f32 %v977, 0.0051020407
      %v1062 = vmul.f32 %v981, 0.0051020407
      %v1063 = vmul.f32 %v985, 0.0051020407
      %v1064 = vmul.f32 %v989, 0.0051020407
      %v1065 = vmul.f32 %v993, 0.0051020407
      %v1066 = vmul.f32 %v997, 0.0051020407
      %v1067 = vmul.f32 %v1001, 0.0051020407
      %v1068 = vmul.f32 %v1005, 0.0051020407
      %v1069 = vmul.f32 %v1009, 0.0051020407
      %v1070 = vmul.f32 %v1013, 0.0051020407
      %v1071 = vmul.f32 %v1017, 0.0051020407
      %v1072 = vmul.f32 %v1021, 0.0051020407
      %v1073 = vmul.f32 %v1025, 0.0051020407
      %v1074 = vmul.f32 %v1029, 0.0051020407
      %v1075 = vadd.f32 %v1030, 1e-05
      %v1076 = vadd.f32 %v1031, 1e-05
      %v1077 = vadd.f32 %v1032, 1e-05
      %v1078 = vadd.f32 %v1033, 1e-05
      %v1079 = vadd.f32 %v1034, 1e-05
      %v1080 = vadd.f32 %v1035, 1e-05
      %v1081 = vadd.f32 %v1036, 1e-05
      %v1082 = vadd.f32 %v1037, 1e-05
      %v1083 = vadd.f32 %v1038, 1e-05
      %v1084 = vadd.f32 %v1039, 1e-05
      %v1085 = vadd.f32 %v1040, 1e-05
      %v1086 = vadd.f32 %v1041, 1e-05
      %v1087 = vadd.f32 %v1042, 1e-05
      %v1088 = vadd.f32 %v1043, 1e-05
      %v1089 = vadd.f32 %v1044, 1e-05
      %v1090 = vadd.f32 %v1045, 1e-05
      %v1091 = vadd.f32 %v1046, 1e-05
      %v1092 = vadd.f32 %v1047, 1e-05
      %v1093 = vadd.f32 %v1048, 1e-05
      %v1094 = vadd.f32 %v1049, 1e-05
      %v1095 = vadd.f32 %v1050, 1e-05
      %v1096 = vadd.f32 %v1051, 1e-05
      %v1097 = vadd.f32 %v1052, 1e-05
      %v1098 = vadd.f32 %v1053, 1e-05
      %v1099 = vadd.f32 %v1054, 1e-05
      %v1100 = vadd.f32 %v1055, 1e-05
      %v1101 = vadd.f32 %v1056, 1e-05
      %v1102 = vadd.f32 %v1057, 1e-05
      %v1103 = vadd.f32 %v1058, 1e-05
      %v1104 = vadd.f32 %v1059, 1e-05
      %v1105 = vadd.f32 %v1060, 1e-05
      %v1106 = vadd.f32 %v1061, 1e-05
      %v1107 = vadd.f32 %v1062, 1e-05
      %v1108 = vadd.f32 %v1063, 1e-05
      %v1109 = vadd.f32 %v1064, 1e-05
      %v1110 = vadd.f32 %v1065, 1e-05
      %v1111 = vadd.f32 %v1066, 1e-05
      %v1112 = vadd.f32 %v1067, 1e-05
      %v1113 = vadd.f32 %v1068, 1e-05
      %v1114 = vadd.f32 %v1069, 1e-05
      %v1115 = vadd.f32 %v1070, 1e-05
      %v1116 = vadd.f32 %v1071, 1e-05
      %v1117 = vadd.f32 %v1072, 1e-05
      %v1118 = vadd.f32 %v1073, 1e-05
      %v1119 = vadd.f32 %v1074, 1e-05
      %v1120 = vrsqrt.pop %v1075
      %v1121 = vrsqrt.pop %v1076
      %v1122 = vrsqrt.pop %v1077
      %v1123 = vrsqrt.pop %v1078
      %v1124 = vrsqrt.pop %v1079
      %v1125 = vrsqrt.pop %v1080
      %v1126 = vrsqrt.pop %v1081
      %v1127 = vrsqrt.pop %v1082
      %v1128 = vrsqrt.pop %v1083
      %v1129 = vrsqrt.pop %v1084
      %v1130 = vrsqrt.pop %v1085
      %v1131 = vrsqrt.pop %v1086
      %v1132 = vrsqrt.pop %v1087
      %v1133 = vrsqrt.pop %v1088
      %v1134 = vrsqrt.pop %v1089
      %v1135 = vrsqrt.pop %v1090
      %v1136 = vrsqrt.pop %v1091
      %v1137 = vrsqrt.pop %v1092
      %v1138 = vrsqrt.pop %v1093
      %v1139 = vrsqrt.pop %v1094
      %v1140 = vrsqrt.pop %v1095
      %v1141 = vrsqrt.pop %v1096
      %v1142 = vrsqrt.pop %v1097
      %v1143 = vrsqrt.pop %v1098
      %v1144 = vrsqrt.pop %v1099
      %v1145 = vrsqrt.pop %v1100
      %v1146 = vrsqrt.pop %v1101
      %v1147 = vrsqrt.pop %v1102
      %v1148 = vrsqrt.pop %v1103
      %v1149 = vrsqrt.pop %v1104
      %v1150 = vrsqrt.pop %v1105
      %v1151 = vrsqrt.pop %v1106
      %v1152 = vrsqrt.pop %v1107
      %v1153 = vrsqrt.pop %v1108
      %v1154 = vrsqrt.pop %v1109
      %v1155 = vrsqrt.pop %v1110
      %v1156 = vrsqrt.pop %v1111
      %v1157 = vrsqrt.pop %v1112
      %v1158 = vrsqrt.pop %v1113
      %v1159 = vrsqrt.pop %v1114
      %v1160 = vrsqrt.pop %v1115
      %v1161 = vrsqrt.pop %v1116
      %v1162 = vrsqrt.pop %v1117
      %v1163 = vrsqrt.pop %v1118
      %v1164 = vrsqrt.pop %v1119
      %v1165 = vld [vmem:[%s165] sm:$0xff]
      %v1166 = vld [vmem:[%s165 + $0x8] sm:$0xff]
      %v1167 = vld [vmem:[%s165 + $0x10] sm:$0xff]
      %v1168 = vld [vmem:[%s165 + $0x18] sm:$0xff]
      %v1169 = vld [vmem:[%s165 + $0x20] sm:$0xff]
      %v1170 = vld [vmem:[%s165 + $0x28] sm:$0xff]
      %v1171 = vld [vmem:[%s165 + $0x30] sm:$0xff]
      %v1172 = vld [vmem:[%s165 + $0x38] sm:$0xff]
      %v1173 = vld [vmem:[%s165 + $0x40] sm:$0xff]
      %v1174 = vld [vmem:[%s165 + $0x48] sm:$0xff]
      %v1175 = vld [vmem:[%s165 + $0x50] sm:$0xff]
      %v1176 = vld [vmem:[%s165 + $0x58] sm:$0xff]
      %v1177 = vld [vmem:[%s165 + $0x60] sm:$0xff]
      %v1178 = vld [vmem:[%s165 + $0x68] sm:$0xff]
      %v1179 = vld [vmem:[%s165 + $0x70] sm:$0xff]
      %v1180 = vld [vmem:[%s165 + $0x78] sm:$0xff]
      %v1181 = vld [vmem:[%s165 + $0x80] sm:$0xff]
      %v1182 = vld [vmem:[%s165 + $0x88] sm:$0xff]
      %v1183 = vld [vmem:[%s165 + $0x90] sm:$0xff]
      %v1184 = vld [vmem:[%s165 + $0x98] sm:$0xff]
      %v1185 = vld [vmem:[%s165 + $0xa0] sm:$0xff]
      %v1186 = vld [vmem:[%s165 + $0xa8] sm:$0xff]
      %v1187 = vld [vmem:[%s165 + $0xb0] sm:$0xff]
      %v1188 = vld [vmem:[%s165 + $0xb8] sm:$0xff]
      %v1189 = vld [vmem:[%s165 + $0xc0] sm:$0xff]
      %v1190 = vld [vmem:[%s165 + $0xc8] sm:$0xff]
      %v1191 = vld [vmem:[%s165 + $0xd0] sm:$0xff]
      %v1192 = vld [vmem:[%s165 + $0xd8] sm:$0xff]
      %v1193 = vld [vmem:[%s165 + $0xe0] sm:$0xff]
      %v1194 = vld [vmem:[%s165 + $0xe8] sm:$0xff]
      %v1195 = vld [vmem:[%s165 + $0xf0] sm:$0xff]
      %v1196 = vld [vmem:[%s165 + $0xf8] sm:$0xff]
      %v1197 = vld [vmem:[%s165 + $0x100] sm:$0xff]
      %v1198 = vld [vmem:[%s165 + $0x108] sm:$0xff]
      %v1199 = vld [vmem:[%s165 + $0x110] sm:$0xff]
      %v1200 = vld [vmem:[%s165 + $0x118] sm:$0xff]
      %v1201 = vld [vmem:[%s165 + $0x120] sm:$0xff]
      %v1202 = vld [vmem:[%s165 + $0x128] sm:$0xff]
      %v1203 = vld [vmem:[%s165 + $0x130] sm:$0xff]
      %v1204 = vld [vmem:[%s165 + $0x138] sm:$0xff]
      %v1205 = vld [vmem:[%s165 + $0x140] sm:$0xff]
      %v1206 = vld [vmem:[%s165 + $0x148] sm:$0xff]
      %v1207 = vld [vmem:[%s165 + $0x150] sm:$0xff]
      %v1208 = vld [vmem:[%s165 + $0x158] sm:$0xff]
      %v1209 = vld [vmem:[%s165 + $0x160] sm:$0xff]
      %v1210 = vmul.f32 %v1165, %v1120
      %v1211 = vmul.f32 %v1166, %v1121
      %v1212 = vmul.f32 %v1167, %v1122
      %v1213 = vmul.f32 %v1168, %v1123
      %v1214 = vmul.f32 %v1169, %v1124
      %v1215 = vmul.f32 %v1170, %v1125
      %v1216 = vmul.f32 %v1171, %v1126
      %v1217 = vmul.f32 %v1172, %v1127
      %v1218 = vmul.f32 %v1173, %v1128
      %v1219 = vmul.f32 %v1174, %v1129
      %v1220 = vmul.f32 %v1175, %v1130
      %v1221 = vmul.f32 %v1176, %v1131
      %v1222 = vmul.f32 %v1177, %v1132
      %v1223 = vmul.f32 %v1178, %v1133
      %v1224 = vmul.f32 %v1179, %v1134
      %v1225 = vmul.f32 %v1180, %v1135
      %v1226 = vmul.f32 %v1181, %v1136
      %v1227 = vmul.f32 %v1182, %v1137
      %v1228 = vmul.f32 %v1183, %v1138
      %v1229 = vmul.f32 %v1184, %v1139
      %v1230 = vmul.f32 %v1185, %v1140
      %v1231 = vmul.f32 %v1186, %v1141
      %v1232 = vmul.f32 %v1187, %v1142
      %v1233 = vmul.f32 %v1188, %v1143
      %v1234 = vmul.f32 %v1189, %v1144
      %v1235 = vmul.f32 %v1190, %v1145
      %v1236 = vmul.f32 %v1191, %v1146
      %v1237 = vmul.f32 %v1192, %v1147
      %v1238 = vmul.f32 %v1193, %v1148
      %v1239 = vmul.f32 %v1194, %v1149
      %v1240 = vmul.f32 %v1195, %v1150
      %v1241 = vmul.f32 %v1196, %v1151
      %v1242 = vmul.f32 %v1197, %v1152
      %v1243 = vmul.f32 %v1198, %v1153
      %v1244 = vmul.f32 %v1199, %v1154
      %v1245 = vmul.f32 %v1200, %v1155
      %v1246 = vmul.f32 %v1201, %v1156
      %v1247 = vmul.f32 %v1202, %v1157
      %v1248 = vmul.f32 %v1203, %v1158
      %v1249 = vmul.f32 %v1204, %v1159
      %v1250 = vmul.f32 %v1205, %v1160
      %v1251 = vmul.f32 %v1206, %v1161
      %v1252 = vmul.f32 %v1207, %v1162
      %v1253 = vmul.f32 %v1208, %v1163
      %v1254 = vmul.f32 %v1209, %v1164
      %v1255 = vmul.f32 %v535, %v1210
      %v1256 = vmul.f32 %v536, %v1211
      %v1257 = vmul.f32 %v537, %v1212
      %v1258 = vmul.f32 %v538, %v1213
      %v1259 = vmul.f32 %v539, %v1214
      %v1260 = vmul.f32 %v540, %v1215
      %v1261 = vmul.f32 %v541, %v1216
      %v1262 = vmul.f32 %v542, %v1217
      %v1263 = vmul.f32 %v543, %v1218
      %v1264 = vmul.f32 %v544, %v1219
      %v1265 = vmul.f32 %v545, %v1220
      %v1266 = vmul.f32 %v546, %v1221
      %v1267 = vmul.f32 %v547, %v1222
      %v1268 = vmul.f32 %v548, %v1223
      %v1269 = vmul.f32 %v549, %v1224
      %v1270 = vmul.f32 %v550, %v1225
      %v1271 = vmul.f32 %v551, %v1226
      %v1272 = vmul.f32 %v552, %v1227
      %v1273 = vmul.f32 %v553, %v1228
      %v1274 = vmul.f32 %v554, %v1229
      %v1275 = vmul.f32 %v555, %v1230
      %v1276 = vmul.f32 %v556, %v1231
      %v1277 = vmul.f32 %v557, %v1232
      %v1278 = vmul.f32 %v558, %v1233
      %v1279 = vmul.f32 %v559, %v1234
      %v1280 = vmul.f32 %v560, %v1235
      %v1281 = vmul.f32 %v561, %v1236
      %v1282 = vmul.f32 %v562, %v1237
      %v1283 = vmul.f32 %v563, %v1238
      %v1284 = vmul.f32 %v564, %v1239
      %v1285 = vmul.f32 %v565, %v1240
      %v1286 = vmul.f32 %v566, %v1241
      %v1287 = vmul.f32 %v567, %v1242
      %v1288 = vmul.f32 %v568, %v1243
      %v1289 = vmul.f32 %v569, %v1244
      %v1290 = vmul.f32 %v570, %v1245
      %v1291 = vmul.f32 %v571, %v1246
      %v1292 = vmul.f32 %v572, %v1247
      %v1293 = vmul.f32 %v573, %v1248
      %v1294 = vmul.f32 %v574, %v1249
      %v1295 = vmul.f32 %v575, %v1250
      %v1296 = vmul.f32 %v576, %v1251
      %v1297 = vmul.f32 %v577, %v1252
      %v1298 = vmul.f32 %v578, %v1253
      %v1299 = vmul.f32 %v579, %v1254
      %1345 = vrot.lane.b32.xlu0 %v1255, 1
      %v1346 = vpop.permute.xlu0 %1345
      %1347 = vrot.lane.b32.xlu0 %v1256, 1
      %v1348 = vpop.permute.xlu0 %1347
      %1349 = vrot.lane.b32.xlu0 %v1257, 1
      %v1350 = vpop.permute.xlu0 %1349
      %1351 = vrot.lane.b32.xlu0 %v1258, 1
      %v1352 = vpop.permute.xlu0 %1351
      %1353 = vrot.lane.b32.xlu0 %v1259, 1
      %v1354 = vpop.permute.xlu0 %1353
      %1355 = vrot.lane.b32.xlu0 %v1260, 1
      %v1356 = vpop.permute.xlu0 %1355
      %1357 = vrot.lane.b32.xlu0 %v1261, 1
      %v1358 = vpop.permute.xlu0 %1357
      %1359 = vrot.lane.b32.xlu0 %v1262, 1
      %v1360 = vpop.permute.xlu0 %1359
      %1361 = vrot.lane.b32.xlu0 %v1263, 1
      %v1362 = vpop.permute.xlu0 %1361
      %1363 = vrot.lane.b32.xlu0 %v1264, 1
      %v1364 = vpop.permute.xlu0 %1363
      %1365 = vrot.lane.b32.xlu0 %v1265, 1
      %v1366 = vpop.permute.xlu0 %1365
      %1367 = vrot.lane.b32.xlu0 %v1266, 1
      %v1368 = vpop.permute.xlu0 %1367
      %1369 = vrot.lane.b32.xlu0 %v1267, 1
      %v1370 = vpop.permute.xlu0 %1369
      %1371 = vrot.lane.b32.xlu0 %v1268, 1
      %v1372 = vpop.permute.xlu0 %1371
      %1373 = vrot.lane.b32.xlu0 %v1269, 1
      %v1374 = vpop.permute.xlu0 %1373
      %1375 = vrot.lane.b32.xlu0 %v1270, 1
      %v1376 = vpop.permute.xlu0 %1375
      %1377 = vrot.lane.b32.xlu0 %v1271, 1
      %v1378 = vpop.permute.xlu0 %1377
      %1379 = vrot.lane.b32.xlu0 %v1272, 1
      %v1380 = vpop.permute.xlu0 %1379
      %1381 = vrot.lane.b32.xlu0 %v1273, 1
      %v1382 = vpop.permute.xlu0 %1381
      %1383 = vrot.lane.b32.xlu0 %v1274, 1
      %v1384 = vpop.permute.xlu0 %1383
      %1385 = vrot.lane.b32.xlu0 %v1275, 1
      %v1386 = vpop.permute.xlu0 %1385
      %1387 = vrot.lane.b32.xlu0 %v1276, 1
      %v1388 = vpop.permute.xlu0 %1387
      %1389 = vrot.lane.b32.xlu0 %v1277, 1
      %v1390 = vpop.permute.xlu0 %1389
      %1391 = vrot.lane.b32.xlu0 %v1278, 1
      %v1392 = vpop.permute.xlu0 %1391
      %1393 = vrot.lane.b32.xlu0 %v1279, 1
      %v1394 = vpop.permute.xlu0 %1393
      %1395 = vrot.lane.b32.xlu0 %v1280, 1
      %v1396 = vpop.permute.xlu0 %1395
      %1397 = vrot.lane.b32.xlu0 %v1281, 1
      %v1398 = vpop.permute.xlu0 %1397
      %1399 = vrot.lane.b32.xlu0 %v1282, 1
      %v1400 = vpop.permute.xlu0 %1399
      %1401 = vrot.lane.b32.xlu0 %v1283, 1
      %v1402 = vpop.permute.xlu0 %1401
      %1403 = vrot.lane.b32.xlu0 %v1284, 1
      %v1404 = vpop.permute.xlu0 %1403
      %1405 = vrot.lane.b32.xlu0 %v1285, 1
      %v1406 = vpop.permute.xlu0 %1405
      %1407 = vrot.lane.b32.xlu0 %v1286, 1
      %v1408 = vpop.permute.xlu0 %1407
      %1409 = vrot.lane.b32.xlu0 %v1287, 1
      %v1410 = vpop.permute.xlu0 %1409
      %1411 = vrot.lane.b32.xlu0 %v1288, 1
      %v1412 = vpop.permute.xlu0 %1411
      %1413 = vrot.lane.b32.xlu0 %v1289, 1
      %v1414 = vpop.permute.xlu0 %1413
      %1415 = vrot.lane.b32.xlu0 %v1290, 1
      %v1416 = vpop.permute.xlu0 %1415
      %1417 = vrot.lane.b32.xlu0 %v1291, 1
      %v1418 = vpop.permute.xlu0 %1417
      %1419 = vrot.lane.b32.xlu0 %v1292, 1
      %v1420 = vpop.permute.xlu0 %1419
      %1421 = vrot.lane.b32.xlu0 %v1293, 1
      %v1422 = vpop.permute.xlu0 %1421
      %1423 = vrot.lane.b32.xlu0 %v1294, 1
      %v1424 = vpop.permute.xlu0 %1423
      %1425 = vrot.lane.b32.xlu0 %v1295, 1
      %v1426 = vpop.permute.xlu0 %1425
      %1427 = vrot.lane.b32.xlu0 %v1296, 1
      %v1428 = vpop.permute.xlu0 %1427
      %1429 = vrot.lane.b32.xlu0 %v1297, 1
      %v1430 = vpop.permute.xlu0 %1429
      %1431 = vrot.lane.b32.xlu0 %v1298, 1
      %v1432 = vpop.permute.xlu0 %1431
      %1433 = vrot.lane.b32.xlu0 %v1299, 1
      %v1434 = vpop.permute.xlu0 %1433
      %v1480 = vsub.f32 %v1165, %v1346
      %v1481 = vsub.f32 %v1166, %v1348
      %v1482 = vsub.f32 %v1167, %v1350
      %v1483 = vsub.f32 %v1168, %v1352
      %v1484 = vsub.f32 %v1169, %v1354
      %v1485 = vsub.f32 %v1170, %v1356
      %v1486 = vsub.f32 %v1171, %v1358
      %v1487 = vsub.f32 %v1172, %v1360
      %v1488 = vsub.f32 %v1173, %v1362
      %v1489 = vsub.f32 %v1174, %v1364
      %v1490 = vsub.f32 %v1175, %v1366
      %v1491 = vsub.f32 %v1176, %v1368
      %v1492 = vsub.f32 %v1177, %v1370
      %v1493 = vsub.f32 %v1178, %v1372
      %v1494 = vsub.f32 %v1179, %v1374
      %v1495 = vsub.f32 %v1180, %v1376
      %v1496 = vsub.f32 %v1181, %v1378
      %v1497 = vsub.f32 %v1182, %v1380
      %v1498 = vsub.f32 %v1183, %v1382
      %v1499 = vsub.f32 %v1184, %v1384
      %v1500 = vsub.f32 %v1185, %v1386
      %v1501 = vsub.f32 %v1186, %v1388
      %v1502 = vsub.f32 %v1187, %v1390
      %v1503 = vsub.f32 %v1188, %v1392
      %v1504 = vsub.f32 %v1189, %v1394
      %v1505 = vsub.f32 %v1190, %v1396
      %v1506 = vsub.f32 %v1191, %v1398
      %v1507 = vsub.f32 %v1192, %v1400
      %v1508 = vsub.f32 %v1193, %v1402
      %v1509 = vsub.f32 %v1194, %v1404
      %v1510 = vsub.f32 %v1195, %v1406
      %v1511 = vsub.f32 %v1196, %v1408
      %v1512 = vsub.f32 %v1197, %v1410
      %v1513 = vsub.f32 %v1198, %v1412
      %v1514 = vsub.f32 %v1199, %v1414
      %v1515 = vsub.f32 %v1200, %v1416
      %v1516 = vsub.f32 %v1201, %v1418
      %v1517 = vsub.f32 %v1202, %v1420
      %v1518 = vsub.f32 %v1203, %v1422
      %v1519 = vsub.f32 %v1204, %v1424
      %v1520 = vsub.f32 %v1205, %v1426
      %v1521 = vsub.f32 %v1206, %v1428
      %v1522 = vsub.f32 %v1207, %v1430
      %v1523 = vsub.f32 %v1208, %v1432
      %v1524 = vsub.f32 %v1209, %v1434
      %1526 = vset.pattern.permute.xlu0 0
      %1527 = vperm.xlu0 %1526, %v1210
      %v1528 = vpop.permute.xlu0 %1527
      %1531 = vset.pattern.permute.xlu0 0
      %1532 = vperm.xlu0 %1531, %v1211
      %v1533 = vpop.permute.xlu0 %1532
      %1536 = vset.pattern.permute.xlu0 0
      %1537 = vperm.xlu0 %1536, %v1212
      %v1538 = vpop.permute.xlu0 %1537
      %1541 = vset.pattern.permute.xlu0 0
      %1542 = vperm.xlu0 %1541, %v1213
      %v1543 = vpop.permute.xlu0 %1542
      %1546 = vset.pattern.permute.xlu0 0
      %1547 = vperm.xlu0 %1546, %v1214
      %v1548 = vpop.permute.xlu0 %1547
      %1551 = vset.pattern.permute.xlu0 0
      %1552 = vperm.xlu0 %1551, %v1215
      %v1553 = vpop.permute.xlu0 %1552
      %1556 = vset.pattern.permute.xlu0 0
      %1557 = vperm.xlu0 %1556, %v1216
      %v1558 = vpop.permute.xlu0 %1557
      %1561 = vset.pattern.permute.xlu0 0
      %1562 = vperm.xlu0 %1561, %v1217
      %v1563 = vpop.permute.xlu0 %1562
      %1566 = vset.pattern.permute.xlu0 0
      %1567 = vperm.xlu0 %1566, %v1218
      %v1568 = vpop.permute.xlu0 %1567
      %1571 = vset.pattern.permute.xlu0 0
      %1572 = vperm.xlu0 %1571, %v1219
      %v1573 = vpop.permute.xlu0 %1572
      %1576 = vset.pattern.permute.xlu0 0
      %1577 = vperm.xlu0 %1576, %v1220
      %v1578 = vpop.permute.xlu0 %1577
      %1581 = vset.pattern.permute.xlu0 0
      %1582 = vperm.xlu0 %1581, %v1221
      %v1583 = vpop.permute.xlu0 %1582
      %1586 = vset.pattern.permute.xlu0 0
      %1587 = vperm.xlu0 %1586, %v1222
      %v1588 = vpop.permute.xlu0 %1587
      %1591 = vset.pattern.permute.xlu0 0
      %1592 = vperm.xlu0 %1591, %v1223
      %v1593 = vpop.permute.xlu0 %1592
      %1596 = vset.pattern.permute.xlu0 0
      %1597 = vperm.xlu0 %1596, %v1224
      %v1598 = vpop.permute.xlu0 %1597
      %1601 = vset.pattern.permute.xlu0 0
      %1602 = vperm.xlu0 %1601, %v1225
      %v1603 = vpop.permute.xlu0 %1602
      %1606 = vset.pattern.permute.xlu0 0
      %1607 = vperm.xlu0 %1606, %v1226
      %v1608 = vpop.permute.xlu0 %1607
      %1611 = vset.pattern.permute.xlu0 0
      %1612 = vperm.xlu0 %1611, %v1227
      %v1613 = vpop.permute.xlu0 %1612
      %1616 = vset.pattern.permute.xlu0 0
      %1617 = vperm.xlu0 %1616, %v1228
      %v1618 = vpop.permute.xlu0 %1617
      %1621 = vset.pattern.permute.xlu0 0
      %1622 = vperm.xlu0 %1621, %v1229
      %v1623 = vpop.permute.xlu0 %1622
      %1626 = vset.pattern.permute.xlu0 0
      %1627 = vperm.xlu0 %1626, %v1230
      %v1628 = vpop.permute.xlu0 %1627
      %1631 = vset.pattern.permute.xlu0 0
      %1632 = vperm.xlu0 %1631, %v1231
      %v1633 = vpop.permute.xlu0 %1632
      %1636 = vset.pattern.permute.xlu0 0
      %1637 = vperm.xlu0 %1636, %v1232
      %v1638 = vpop.permute.xlu0 %1637
      %1641 = vset.pattern.permute.xlu0 0
      %1642 = vperm.xlu0 %1641, %v1233
      %v1643 = vpop.permute.xlu0 %1642
      %1646 = vset.pattern.permute.xlu0 0
      %1647 = vperm.xlu0 %1646, %v1234
      %v1648 = vpop.permute.xlu0 %1647
      %1651 = vset.pattern.permute.xlu0 0
      %1652 = vperm.xlu0 %1651, %v1235
      %v1653 = vpop.permute.xlu0 %1652
      %1656 = vset.pattern.permute.xlu0 0
      %1657 = vperm.xlu0 %1656, %v1236
      %v1658 = vpop.permute.xlu0 %1657
      %1661 = vset.pattern.permute.xlu0 0
      %1662 = vperm.xlu0 %1661, %v1237
      %v1663 = vpop.permute.xlu0 %1662
      %1666 = vset.pattern.permute.xlu0 0
      %1667 = vperm.xlu0 %1666, %v1238
      %v1668 = vpop.permute.xlu0 %1667
      %1671 = vset.pattern.permute.xlu0 0
      %1672 = vperm.xlu0 %1671, %v1239
      %v1673 = vpop.permute.xlu0 %1672
      %1676 = vset.pattern.permute.xlu0 0
      %1677 = vperm.xlu0 %1676, %v1240
      %v1678 = vpop.permute.xlu0 %1677
      %1681 = vset.pattern.permute.xlu0 0
      %1682 = vperm.xlu0 %1681, %v1241
      %v1683 = vpop.permute.xlu0 %1682
      %1686 = vset.pattern.permute.xlu0 0
      %1687 = vperm.xlu0 %1686, %v1242
      %v1688 = vpop.permute.xlu0 %1687
      %1691 = vset.pattern.permute.xlu0 0
      %1692 = vperm.xlu0 %1691, %v1243
      %v1693 = vpop.permute.xlu0 %1692
      %1696 = vset.pattern.permute.xlu0 0
      %1697 = vperm.xlu0 %1696, %v1244
      %v1698 = vpop.permute.xlu0 %1697
      %1701 = vset.pattern.permute.xlu0 0
      %1702 = vperm.xlu0 %1701, %v1245
      %v1703 = vpop.permute.xlu0 %1702
      %1706 = vset.pattern.permute.xlu0 0
      %1707 = vperm.xlu0 %1706, %v1246
      %v1708 = vpop.permute.xlu0 %1707
      %1711 = vset.pattern.permute.xlu0 0
      %1712 = vperm.xlu0 %1711, %v1247
      %v1713 = vpop.permute.xlu0 %1712
      %1716 = vset.pattern.permute.xlu0 0
      %1717 = vperm.xlu0 %1716, %v1248
      %v1718 = vpop.permute.xlu0 %1717
      %1721 = vset.pattern.permute.xlu0 0
      %1722 = vperm.xlu0 %1721, %v1249
      %v1723 = vpop.permute.xlu0 %1722
      %1726 = vset.pattern.permute.xlu0 0
      %1727 = vperm.xlu0 %1726, %v1250
      %v1728 = vpop.permute.xlu0 %1727
      %1731 = vset.pattern.permute.xlu0 0
      %1732 = vperm.xlu0 %1731, %v1251
      %v1733 = vpop.permute.xlu0 %1732
      %1736 = vset.pattern.permute.xlu0 0
      %1737 = vperm.xlu0 %1736, %v1252
      %v1738 = vpop.permute.xlu0 %1737
      %1741 = vset.pattern.permute.xlu0 0
      %1742 = vperm.xlu0 %1741, %v1253
      %v1743 = vpop.permute.xlu0 %1742
      %1746 = vset.pattern.permute.xlu0 0
      %1747 = vperm.xlu0 %1746, %v1254
      %v1748 = vpop.permute.xlu0 %1747
      %v1750 = vmul.f32 %v174, %v1528
      %v1751 = vmul.f32 %v175, %v1528
      %v1752 = vmul.f32 %v176, %v1533
      %v1753 = vmul.f32 %v177, %v1533
      %v1754 = vmul.f32 %v178, %v1538
      %v1755 = vmul.f32 %v179, %v1538
      %v1756 = vmul.f32 %v180, %v1543
      %v1757 = vmul.f32 %v181, %v1543
      %v1758 = vmul.f32 %v182, %v1548
      %v1759 = vmul.f32 %v183, %v1548
      %v1760 = vmul.f32 %v184, %v1553
      %v1761 = vmul.f32 %v185, %v1553
      %v1762 = vmul.f32 %v186, %v1558
      %v1763 = vmul.f32 %v187, %v1558
      %v1764 = vmul.f32 %v188, %v1563
      %v1765 = vmul.f32 %v189, %v1563
      %v1766 = vmul.f32 %v190, %v1568
      %v1767 = vmul.f32 %v191, %v1568
      %v1768 = vmul.f32 %v192, %v1573
      %v1769 = vmul.f32 %v193, %v1573
      %v1770 = vmul.f32 %v194, %v1578
      %v1771 = vmul.f32 %v195, %v1578
      %v1772 = vmul.f32 %v196, %v1583
      %v1773 = vmul.f32 %v197, %v1583
      %v1774 = vmul.f32 %v198, %v1588
      %v1775 = vmul.f32 %v199, %v1588
      %v1776 = vmul.f32 %v200, %v1593
      %v1777 = vmul.f32 %v201, %v1593
      %v1778 = vmul.f32 %v202, %v1598
      %v1779 = vmul.f32 %v203, %v1598
      %v1780 = vmul.f32 %v204, %v1603
      %v1781 = vmul.f32 %v205, %v1603
      %v1782 = vmul.f32 %v206, %v1608
      %v1783 = vmul.f32 %v207, %v1608
      %v1784 = vmul.f32 %v208, %v1613
      %v1785 = vmul.f32 %v209, %v1613
      %v1786 = vmul.f32 %v210, %v1618
      %v1787 = vmul.f32 %v211, %v1618
      %v1788 = vmul.f32 %v212, %v1623
      %v1789 = vmul.f32 %v213, %v1623
      %v1790 = vmul.f32 %v214, %v1628
      %v1791 = vmul.f32 %v215, %v1628
      %v1792 = vmul.f32 %v216, %v1633
      %v1793 = vmul.f32 %v217, %v1633
      %v1794 = vmul.f32 %v218, %v1638
      %v1795 = vmul.f32 %v219, %v1638
      %v1796 = vmul.f32 %v220, %v1643
      %v1797 = vmul.f32 %v221, %v1643
      %v1798 = vmul.f32 %v222, %v1648
      %v1799 = vmul.f32 %v223, %v1648
      %v1800 = vmul.f32 %v224, %v1653
      %v1801 = vmul.f32 %v225, %v1653
      %v1802 = vmul.f32 %v226, %v1658
      %v1803 = vmul.f32 %v227, %v1658
      %v1804 = vmul.f32 %v228, %v1663
      %v1805 = vmul.f32 %v229, %v1663
      %v1806 = vmul.f32 %v230, %v1668
      %v1807 = vmul.f32 %v231, %v1668
      %v1808 = vmul.f32 %v232, %v1673
      %v1809 = vmul.f32 %v233, %v1673
      %v1810 = vmul.f32 %v234, %v1678
      %v1811 = vmul.f32 %v235, %v1678
      %v1812 = vmul.f32 %v236, %v1683
      %v1813 = vmul.f32 %v237, %v1683
      %v1814 = vmul.f32 %v238, %v1688
      %v1815 = vmul.f32 %v239, %v1688
      %v1816 = vmul.f32 %v240, %v1693
      %v1817 = vmul.f32 %v241, %v1693
      %v1818 = vmul.f32 %v242, %v1698
      %v1819 = vmul.f32 %v243, %v1698
      %v1820 = vmul.f32 %v244, %v1703
      %v1821 = vmul.f32 %v245, %v1703
      %v1822 = vmul.f32 %v246, %v1708
      %v1823 = vmul.f32 %v247, %v1708
      %v1824 = vmul.f32 %v248, %v1713
      %v1825 = vmul.f32 %v249, %v1713
      %v1826 = vmul.f32 %v250, %v1718
      %v1827 = vmul.f32 %v251, %v1718
      %v1828 = vmul.f32 %v252, %v1723
      %v1829 = vmul.f32 %v253, %v1723
      %v1830 = vmul.f32 %v254, %v1728
      %v1831 = vmul.f32 %v255, %v1728
      %v1832 = vmul.f32 %v256, %v1733
      %v1833 = vmul.f32 %v257, %v1733
      %v1834 = vmul.f32 %v258, %v1738
      %v1835 = vmul.f32 %v259, %v1738
      %v1836 = vmul.f32 %v260, %v1743
      %v1837 = vmul.f32 %v261, %v1743
      %v1838 = vmul.f32 %v262, %v1748
      %v1839 = vmul.f32 %v263, %v1748
      %1841 = vset.pattern.permute.xlu0 1
      %1842 = vperm.xlu0 %1841, %v1480
      %v1843 = vpop.permute.xlu0 %1842
      %1846 = vset.pattern.permute.xlu0 1
      %1847 = vperm.xlu0 %1846, %v1481
      %v1848 = vpop.permute.xlu0 %1847
      %1851 = vset.pattern.permute.xlu0 1
      %1852 = vperm.xlu0 %1851, %v1482
      %v1853 = vpop.permute.xlu0 %1852
      %1856 = vset.pattern.permute.xlu0 1
      %1857 = vperm.xlu0 %1856, %v1483
      %v1858 = vpop.permute.xlu0 %1857
      %1861 = vset.pattern.permute.xlu0 1
      %1862 = vperm.xlu0 %1861, %v1484
      %v1863 = vpop.permute.xlu0 %1862
      %1866 = vset.pattern.permute.xlu0 1
      %1867 = vperm.xlu0 %1866, %v1485
      %v1868 = vpop.permute.xlu0 %1867
      %1871 = vset.pattern.permute.xlu0 1
      %1872 = vperm.xlu0 %1871, %v1486
      %v1873 = vpop.permute.xlu0 %1872
      %1876 = vset.pattern.permute.xlu0 1
      %1877 = vperm.xlu0 %1876, %v1487
      %v1878 = vpop.permute.xlu0 %1877
      %1881 = vset.pattern.permute.xlu0 1
      %1882 = vperm.xlu0 %1881, %v1488
      %v1883 = vpop.permute.xlu0 %1882
      %1886 = vset.pattern.permute.xlu0 1
      %1887 = vperm.xlu0 %1886, %v1489
      %v1888 = vpop.permute.xlu0 %1887
      %1891 = vset.pattern.permute.xlu0 1
      %1892 = vperm.xlu0 %1891, %v1490
      %v1893 = vpop.permute.xlu0 %1892
      %1896 = vset.pattern.permute.xlu0 1
      %1897 = vperm.xlu0 %1896, %v1491
      %v1898 = vpop.permute.xlu0 %1897
      %1901 = vset.pattern.permute.xlu0 1
      %1902 = vperm.xlu0 %1901, %v1492
      %v1903 = vpop.permute.xlu0 %1902
      %1906 = vset.pattern.permute.xlu0 1
      %1907 = vperm.xlu0 %1906, %v1493
      %v1908 = vpop.permute.xlu0 %1907
      %1911 = vset.pattern.permute.xlu0 1
      %1912 = vperm.xlu0 %1911, %v1494
      %v1913 = vpop.permute.xlu0 %1912
      %1916 = vset.pattern.permute.xlu0 1
      %1917 = vperm.xlu0 %1916, %v1495
      %v1918 = vpop.permute.xlu0 %1917
      %1921 = vset.pattern.permute.xlu0 1
      %1922 = vperm.xlu0 %1921, %v1496
      %v1923 = vpop.permute.xlu0 %1922
      %1926 = vset.pattern.permute.xlu0 1
      %1927 = vperm.xlu0 %1926, %v1497
      %v1928 = vpop.permute.xlu0 %1927
      %1931 = vset.pattern.permute.xlu0 1
      %1932 = vperm.xlu0 %1931, %v1498
      %v1933 = vpop.permute.xlu0 %1932
      %1936 = vset.pattern.permute.xlu0 1
      %1937 = vperm.xlu0 %1936, %v1499
      %v1938 = vpop.permute.xlu0 %1937
      %1941 = vset.pattern.permute.xlu0 1
      %1942 = vperm.xlu0 %1941, %v1500
      %v1943 = vpop.permute.xlu0 %1942
      %1946 = vset.pattern.permute.xlu0 1
      %1947 = vperm.xlu0 %1946, %v1501
      %v1948 = vpop.permute.xlu0 %1947
      %1951 = vset.pattern.permute.xlu0 1
      %1952 = vperm.xlu0 %1951, %v1502
      %v1953 = vpop.permute.xlu0 %1952
      %1956 = vset.pattern.permute.xlu0 1
      %1957 = vperm.xlu0 %1956, %v1503
      %v1958 = vpop.permute.xlu0 %1957
      %1961 = vset.pattern.permute.xlu0 1
      %1962 = vperm.xlu0 %1961, %v1504
      %v1963 = vpop.permute.xlu0 %1962
      %1966 = vset.pattern.permute.xlu0 1
      %1967 = vperm.xlu0 %1966, %v1505
      %v1968 = vpop.permute.xlu0 %1967
      %1971 = vset.pattern.permute.xlu0 1
      %1972 = vperm.xlu0 %1971, %v1506
      %v1973 = vpop.permute.xlu0 %1972
      %1976 = vset.pattern.permute.xlu0 1
      %1977 = vperm.xlu0 %1976, %v1507
      %v1978 = vpop.permute.xlu0 %1977
      %1981 = vset.pattern.permute.xlu0 1
      %1982 = vperm.xlu0 %1981, %v1508
      %v1983 = vpop.permute.xlu0 %1982
      %1986 = vset.pattern.permute.xlu0 1
      %1987 = vperm.xlu0 %1986, %v1509
      %v1988 = vpop.permute.xlu0 %1987
      %1991 = vset.pattern.permute.xlu0 1
      %1992 = vperm.xlu0 %1991, %v1510
      %v1993 = vpop.permute.xlu0 %1992
      %1996 = vset.pattern.permute.xlu0 1
      %1997 = vperm.xlu0 %1996, %v1511
      %v1998 = vpop.permute.xlu0 %1997
      %2001 = vset.pattern.permute.xlu0 1
      %2002 = vperm.xlu0 %2001, %v1512
      %v2003 = vpop.permute.xlu0 %2002
      %2006 = vset.pattern.permute.xlu0 1
      %2007 = vperm.xlu0 %2006, %v1513
      %v2008 = vpop.permute.xlu0 %2007
      %2011 = vset.pattern.permute.xlu0 1
      %2012 = vperm.xlu0 %2011, %v1514
      %v2013 = vpop.permute.xlu0 %2012
      %2016 = vset.pattern.permute.xlu0 1
      %2017 = vperm.xlu0 %2016, %v1515
      %v2018 = vpop.permute.xlu0 %2017
      %2021 = vset.pattern.permute.xlu0 1
      %2022 = vperm.xlu0 %2021, %v1516
      %v2023 = vpop.permute.xlu0 %2022
      %2026 = vset.pattern.permute.xlu0 1
      %2027 = vperm.xlu0 %2026, %v1517
      %v2028 = vpop.permute.xlu0 %2027
      %2031 = vset.pattern.permute.xlu0 1
      %2032 = vperm.xlu0 %2031, %v1518
      %v2033 = vpop.permute.xlu0 %2032
      %2036 = vset.pattern.permute.xlu0 1
      %2037 = vperm.xlu0 %2036, %v1519
      %v2038 = vpop.permute.xlu0 %2037
      %2041 = vset.pattern.permute.xlu0 1
      %2042 = vperm.xlu0 %2041, %v1520
      %v2043 = vpop.permute.xlu0 %2042
      %2046 = vset.pattern.permute.xlu0 1
      %2047 = vperm.xlu0 %2046, %v1521
      %v2048 = vpop.permute.xlu0 %2047
      %2051 = vset.pattern.permute.xlu0 1
      %2052 = vperm.xlu0 %2051, %v1522
      %v2053 = vpop.permute.xlu0 %2052
      %2056 = vset.pattern.permute.xlu0 1
      %2057 = vperm.xlu0 %2056, %v1523
      %v2058 = vpop.permute.xlu0 %2057
      %2061 = vset.pattern.permute.xlu0 1
      %2062 = vperm.xlu0 %2061, %v1524
      %v2063 = vpop.permute.xlu0 %2062
      %v2065 = vadd.f32 %v1750, %v1843
      %v2066 = vadd.f32 %v1751, %v1843
      %v2067 = vadd.f32 %v1752, %v1848
      %v2068 = vadd.f32 %v1753, %v1848
      %v2069 = vadd.f32 %v1754, %v1853
      %v2070 = vadd.f32 %v1755, %v1853
      %v2071 = vadd.f32 %v1756, %v1858
      %v2072 = vadd.f32 %v1757, %v1858
      %v2073 = vadd.f32 %v1758, %v1863
      %v2074 = vadd.f32 %v1759, %v1863
      %v2075 = vadd.f32 %v1760, %v1868
      %v2076 = vadd.f32 %v1761, %v1868
      %v2077 = vadd.f32 %v1762, %v1873
      %v2078 = vadd.f32 %v1763, %v1873
      %v2079 = vadd.f32 %v1764, %v1878
      %v2080 = vadd.f32 %v1765, %v1878
      %v2081 = vadd.f32 %v1766, %v1883
      %v2082 = vadd.f32 %v1767, %v1883
      %v2083 = vadd.f32 %v1768, %v1888
      %v2084 = vadd.f32 %v1769, %v1888
      %v2085 = vadd.f32 %v1770, %v1893
      %v2086 = vadd.f32 %v1771, %v1893
      %v2087 = vadd.f32 %v1772, %v1898
      %v2088 = vadd.f32 %v1773, %v1898
      %v2089 = vadd.f32 %v1774, %v1903
      %v2090 = vadd.f32 %v1775, %v1903
      %v2091 = vadd.f32 %v1776, %v1908
      %v2092 = vadd.f32 %v1777, %v1908
      %v2093 = vadd.f32 %v1778, %v1913
      %v2094 = vadd.f32 %v1779, %v1913
      %v2095 = vadd.f32 %v1780, %v1918
      %v2096 = vadd.f32 %v1781, %v1918
      %v2097 = vadd.f32 %v1782, %v1923
      %v2098 = vadd.f32 %v1783, %v1923
      %v2099 = vadd.f32 %v1784, %v1928
      %v2100 = vadd.f32 %v1785, %v1928
      %v2101 = vadd.f32 %v1786, %v1933
      %v2102 = vadd.f32 %v1787, %v1933
      %v2103 = vadd.f32 %v1788, %v1938
      %v2104 = vadd.f32 %v1789, %v1938
      %v2105 = vadd.f32 %v1790, %v1943
      %v2106 = vadd.f32 %v1791, %v1943
      %v2107 = vadd.f32 %v1792, %v1948
      %v2108 = vadd.f32 %v1793, %v1948
      %v2109 = vadd.f32 %v1794, %v1953
      %v2110 = vadd.f32 %v1795, %v1953
      %v2111 = vadd.f32 %v1796, %v1958
      %v2112 = vadd.f32 %v1797, %v1958
      %v2113 = vadd.f32 %v1798, %v1963
      %v2114 = vadd.f32 %v1799, %v1963
      %v2115 = vadd.f32 %v1800, %v1968
      %v2116 = vadd.f32 %v1801, %v1968
      %v2117 = vadd.f32 %v1802, %v1973
      %v2118 = vadd.f32 %v1803, %v1973
      %v2119 = vadd.f32 %v1804, %v1978
      %v2120 = vadd.f32 %v1805, %v1978
      %v2121 = vadd.f32 %v1806, %v1983
      %v2122 = vadd.f32 %v1807, %v1983
      %v2123 = vadd.f32 %v1808, %v1988
      %v2124 = vadd.f32 %v1809, %v1988
      %v2125 = vadd.f32 %v1810, %v1993
      %v2126 = vadd.f32 %v1811, %v1993
      %v2127 = vadd.f32 %v1812, %v1998
      %v2128 = vadd.f32 %v1813, %v1998
      %v2129 = vadd.f32 %v1814, %v2003
      %v2130 = vadd.f32 %v1815, %v2003
      %v2131 = vadd.f32 %v1816, %v2008
      %v2132 = vadd.f32 %v1817, %v2008
      %v2133 = vadd.f32 %v1818, %v2013
      %v2134 = vadd.f32 %v1819, %v2013
      %v2135 = vadd.f32 %v1820, %v2018
      %v2136 = vadd.f32 %v1821, %v2018
      %v2137 = vadd.f32 %v1822, %v2023
      %v2138 = vadd.f32 %v1823, %v2023
      %v2139 = vadd.f32 %v1824, %v2028
      %v2140 = vadd.f32 %v1825, %v2028
      %v2141 = vadd.f32 %v1826, %v2033
      %v2142 = vadd.f32 %v1827, %v2033
      %v2143 = vadd.f32 %v1828, %v2038
      %v2144 = vadd.f32 %v1829, %v2038
      %v2145 = vadd.f32 %v1830, %v2043
      %v2146 = vadd.f32 %v1831, %v2043
      %v2147 = vadd.f32 %v1832, %v2048
      %v2148 = vadd.f32 %v1833, %v2048
      %v2149 = vadd.f32 %v1834, %v2053
      %v2150 = vadd.f32 %v1835, %v2053
      %v2151 = vadd.f32 %v1836, %v2058
      %v2152 = vadd.f32 %v1837, %v2058
      %v2153 = vadd.f32 %v1838, %v2063
      %v2154 = vadd.f32 %v1839, %v2063
      %v2155 = vmax.f32 %v2065, 0.0
      %v2156 = vmax.f32 %v2066, 0.0
      %v2157 = vmax.f32 %v2067, 0.0
      %v2158 = vmax.f32 %v2068, 0.0
      %v2159 = vmax.f32 %v2069, 0.0
      %v2160 = vmax.f32 %v2070, 0.0
      %v2161 = vmax.f32 %v2071, 0.0
      %v2162 = vmax.f32 %v2072, 0.0
      %v2163 = vmax.f32 %v2073, 0.0
      %v2164 = vmax.f32 %v2074, 0.0
      %v2165 = vmax.f32 %v2075, 0.0
      %v2166 = vmax.f32 %v2076, 0.0
      %v2167 = vmax.f32 %v2077, 0.0
      %v2168 = vmax.f32 %v2078, 0.0
      %v2169 = vmax.f32 %v2079, 0.0
      %v2170 = vmax.f32 %v2080, 0.0
      %v2171 = vmax.f32 %v2081, 0.0
      %v2172 = vmax.f32 %v2082, 0.0
      %v2173 = vmax.f32 %v2083, 0.0
      %v2174 = vmax.f32 %v2084, 0.0
      %v2175 = vmax.f32 %v2085, 0.0
      %v2176 = vmax.f32 %v2086, 0.0
      %v2177 = vmax.f32 %v2087, 0.0
      %v2178 = vmax.f32 %v2088, 0.0
      %v2179 = vmax.f32 %v2089, 0.0
      %v2180 = vmax.f32 %v2090, 0.0
      %v2181 = vmax.f32 %v2091, 0.0
      %v2182 = vmax.f32 %v2092, 0.0
      %v2183 = vmax.f32 %v2093, 0.0
      %v2184 = vmax.f32 %v2094, 0.0
      %v2185 = vmax.f32 %v2095, 0.0
      %v2186 = vmax.f32 %v2096, 0.0
      %v2187 = vmax.f32 %v2097, 0.0
      %v2188 = vmax.f32 %v2098, 0.0
      %v2189 = vmax.f32 %v2099, 0.0
      %v2190 = vmax.f32 %v2100, 0.0
      %v2191 = vmax.f32 %v2101, 0.0
      %v2192 = vmax.f32 %v2102, 0.0
      %v2193 = vmax.f32 %v2103, 0.0
      %v2194 = vmax.f32 %v2104, 0.0
      %v2195 = vmax.f32 %v2105, 0.0
      %v2196 = vmax.f32 %v2106, 0.0
      %v2197 = vmax.f32 %v2107, 0.0
      %v2198 = vmax.f32 %v2108, 0.0
      %v2199 = vmax.f32 %v2109, 0.0
      %v2200 = vmax.f32 %v2110, 0.0
      %v2201 = vmax.f32 %v2111, 0.0
      %v2202 = vmax.f32 %v2112, 0.0
      %v2203 = vmax.f32 %v2113, 0.0
      %v2204 = vmax.f32 %v2114, 0.0
      %v2205 = vmax.f32 %v2115, 0.0
      %v2206 = vmax.f32 %v2116, 0.0
      %v2207 = vmax.f32 %v2117, 0.0
      %v2208 = vmax.f32 %v2118, 0.0
      %v2209 = vmax.f32 %v2119, 0.0
      %v2210 = vmax.f32 %v2120, 0.0
      %v2211 = vmax.f32 %v2121, 0.0
      %v2212 = vmax.f32 %v2122, 0.0
      %v2213 = vmax.f32 %v2123, 0.0
      %v2214 = vmax.f32 %v2124, 0.0
      %v2215 = vmax.f32 %v2125, 0.0
      %v2216 = vmax.f32 %v2126, 0.0
      %v2217 = vmax.f32 %v2127, 0.0
      %v2218 = vmax.f32 %v2128, 0.0
      %v2219 = vmax.f32 %v2129, 0.0
      %v2220 = vmax.f32 %v2130, 0.0
      %v2221 = vmax.f32 %v2131, 0.0
      %v2222 = vmax.f32 %v2132, 0.0
      %v2223 = vmax.f32 %v2133, 0.0
      %v2224 = vmax.f32 %v2134, 0.0
      %v2225 = vmax.f32 %v2135, 0.0
      %v2226 = vmax.f32 %v2136, 0.0
      %v2227 = vmax.f32 %v2137, 0.0
      %v2228 = vmax.f32 %v2138, 0.0
      %v2229 = vmax.f32 %v2139, 0.0
      %v2230 = vmax.f32 %v2140, 0.0
      %v2231 = vmax.f32 %v2141, 0.0
      %v2232 = vmax.f32 %v2142, 0.0
      %v2233 = vmax.f32 %v2143, 0.0
      %v2234 = vmax.f32 %v2144, 0.0
      %v2235 = vmax.f32 %v2145, 0.0
      %v2236 = vmax.f32 %v2146, 0.0
      %v2237 = vmax.f32 %v2147, 0.0
      %v2238 = vmax.f32 %v2148, 0.0
      %v2239 = vmax.f32 %v2149, 0.0
      %v2240 = vmax.f32 %v2150, 0.0
      %v2241 = vmax.f32 %v2151, 0.0
      %v2242 = vmax.f32 %v2152, 0.0
      %v2243 = vmax.f32 %v2153, 0.0
      %v2244 = vmax.f32 %v2154, 0.0
      %2245 = vst [vmem:[%s172] sm:$0xff] %v2155
      %2246 = vst.msk [vmem:[%s172 + $0x8] sm:$0xff] %vm354, %v2156
      %2247 = vst [vmem:[%s172 + $0x10] sm:$0xff] %v2157
      %2248 = vst.msk [vmem:[%s172 + $0x18] sm:$0xff] %vm354, %v2158
      %2249 = vst [vmem:[%s172 + $0x20] sm:$0xff] %v2159
      %2250 = vst.msk [vmem:[%s172 + $0x28] sm:$0xff] %vm354, %v2160
      %2251 = vst [vmem:[%s172 + $0x30] sm:$0xff] %v2161
      %2252 = vst.msk [vmem:[%s172 + $0x38] sm:$0xff] %vm354, %v2162
      %2253 = vst [vmem:[%s172 + $0x40] sm:$0xff] %v2163
      %2254 = vst.msk [vmem:[%s172 + $0x48] sm:$0xff] %vm354, %v2164
      %2255 = vst [vmem:[%s172 + $0x50] sm:$0xff] %v2165
      %2256 = vst.msk [vmem:[%s172 + $0x58] sm:$0xff] %vm354, %v2166
      %2257 = vst [vmem:[%s172 + $0x60] sm:$0xff] %v2167
      %2258 = vst.msk [vmem:[%s172 + $0x68] sm:$0xff] %vm354, %v2168
      %2259 = vst [vmem:[%s172 + $0x70] sm:$0xff] %v2169
      %2260 = vst.msk [vmem:[%s172 + $0x78] sm:$0xff] %vm354, %v2170
      %2261 = vst [vmem:[%s172 + $0x80] sm:$0xff] %v2171
      %2262 = vst.msk [vmem:[%s172 + $0x88] sm:$0xff] %vm354, %v2172
      %2263 = vst [vmem:[%s172 + $0x90] sm:$0xff] %v2173
      %2264 = vst.msk [vmem:[%s172 + $0x98] sm:$0xff] %vm354, %v2174
      %2265 = vst [vmem:[%s172 + $0xa0] sm:$0xff] %v2175
      %2266 = vst.msk [vmem:[%s172 + $0xa8] sm:$0xff] %vm354, %v2176
      %2267 = vst [vmem:[%s172 + $0xb0] sm:$0xff] %v2177
      %2268 = vst.msk [vmem:[%s172 + $0xb8] sm:$0xff] %vm354, %v2178
      %2269 = vst [vmem:[%s172 + $0xc0] sm:$0xff] %v2179
      %2270 = vst.msk [vmem:[%s172 + $0xc8] sm:$0xff] %vm354, %v2180
      %2271 = vst [vmem:[%s172 + $0xd0] sm:$0xff] %v2181
      %2272 = vst.msk [vmem:[%s172 + $0xd8] sm:$0xff] %vm354, %v2182
      %2273 = vst [vmem:[%s172 + $0xe0] sm:$0xff] %v2183
      %2274 = vst.msk [vmem:[%s172 + $0xe8] sm:$0xff] %vm354, %v2184
      %2275 = vst [vmem:[%s172 + $0xf0] sm:$0xff] %v2185
      %2276 = vst.msk [vmem:[%s172 + $0xf8] sm:$0xff] %vm354, %v2186
      %2277 = vst [vmem:[%s172 + $0x100] sm:$0xff] %v2187
      %2278 = vst.msk [vmem:[%s172 + $0x108] sm:$0xff] %vm354, %v2188
      %2279 = vst [vmem:[%s172 + $0x110] sm:$0xff] %v2189
      %2280 = vst.msk [vmem:[%s172 + $0x118] sm:$0xff] %vm354, %v2190
      %2281 = vst [vmem:[%s172 + $0x120] sm:$0xff] %v2191
      %2282 = vst.msk [vmem:[%s172 + $0x128] sm:$0xff] %vm354, %v2192
      %2283 = vst [vmem:[%s172 + $0x130] sm:$0xff] %v2193
      %2284 = vst.msk [vmem:[%s172 + $0x138] sm:$0xff] %vm354, %v2194
      %2285 = vst [vmem:[%s172 + $0x140] sm:$0xff] %v2195
      %2286 = vst.msk [vmem:[%s172 + $0x148] sm:$0xff] %vm354, %v2196
      %2287 = vst [vmem:[%s172 + $0x150] sm:$0xff] %v2197
      %2288 = vst.msk [vmem:[%s172 + $0x158] sm:$0xff] %vm354, %v2198
      %2289 = vst [vmem:[%s172 + $0x160] sm:$0xff] %v2199
      %2290 = vst.msk [vmem:[%s172 + $0x168] sm:$0xff] %vm354, %v2200
      %2291 = vst [vmem:[%s172 + $0x170] sm:$0xff] %v2201
      %2292 = vst.msk [vmem:[%s172 + $0x178] sm:$0xff] %vm354, %v2202
      %2293 = vst [vmem:[%s172 + $0x180] sm:$0xff] %v2203
      %2294 = vst.msk [vmem:[%s172 + $0x188] sm:$0xff] %vm354, %v2204
      %2295 = vst [vmem:[%s172 + $0x190] sm:$0xff] %v2205
      %2296 = vst.msk [vmem:[%s172 + $0x198] sm:$0xff] %vm354, %v2206
      %2297 = vst [vmem:[%s172 + $0x1a0] sm:$0xff] %v2207
      %2298 = vst.msk [vmem:[%s172 + $0x1a8] sm:$0xff] %vm354, %v2208
      %2299 = vst [vmem:[%s172 + $0x1b0] sm:$0xff] %v2209
      %2300 = vst.msk [vmem:[%s172 + $0x1b8] sm:$0xff] %vm354, %v2210
      %2301 = vst [vmem:[%s172 + $0x1c0] sm:$0xff] %v2211
      %2302 = vst.msk [vmem:[%s172 + $0x1c8] sm:$0xff] %vm354, %v2212
      %2303 = vst [vmem:[%s172 + $0x1d0] sm:$0xff] %v2213
      %2304 = vst.msk [vmem:[%s172 + $0x1d8] sm:$0xff] %vm354, %v2214
      %2305 = vst [vmem:[%s172 + $0x1e0] sm:$0xff] %v2215
      %2306 = vst.msk [vmem:[%s172 + $0x1e8] sm:$0xff] %vm354, %v2216
      %2307 = vst [vmem:[%s172 + $0x1f0] sm:$0xff] %v2217
      %2308 = vst.msk [vmem:[%s172 + $0x1f8] sm:$0xff] %vm354, %v2218
      %2309 = vst [vmem:[%s172 + $0x200] sm:$0xff] %v2219
      %2310 = vst.msk [vmem:[%s172 + $0x208] sm:$0xff] %vm354, %v2220
      %2311 = vst [vmem:[%s172 + $0x210] sm:$0xff] %v2221
      %2312 = vst.msk [vmem:[%s172 + $0x218] sm:$0xff] %vm354, %v2222
      %2313 = vst [vmem:[%s172 + $0x220] sm:$0xff] %v2223
      %2314 = vst.msk [vmem:[%s172 + $0x228] sm:$0xff] %vm354, %v2224
      %2315 = vst [vmem:[%s172 + $0x230] sm:$0xff] %v2225
      %2316 = vst.msk [vmem:[%s172 + $0x238] sm:$0xff] %vm354, %v2226
      %2317 = vst [vmem:[%s172 + $0x240] sm:$0xff] %v2227
      %2318 = vst.msk [vmem:[%s172 + $0x248] sm:$0xff] %vm354, %v2228
      %2319 = vst [vmem:[%s172 + $0x250] sm:$0xff] %v2229
      %2320 = vst.msk [vmem:[%s172 + $0x258] sm:$0xff] %vm354, %v2230
      %2321 = vst [vmem:[%s172 + $0x260] sm:$0xff] %v2231
      %2322 = vst.msk [vmem:[%s172 + $0x268] sm:$0xff] %vm354, %v2232
      %2323 = vst [vmem:[%s172 + $0x270] sm:$0xff] %v2233
      %2324 = vst.msk [vmem:[%s172 + $0x278] sm:$0xff] %vm354, %v2234
      %2325 = vst [vmem:[%s172 + $0x280] sm:$0xff] %v2235
      %2326 = vst.msk [vmem:[%s172 + $0x288] sm:$0xff] %vm354, %v2236
      %2327 = vst [vmem:[%s172 + $0x290] sm:$0xff] %v2237
      %2328 = vst.msk [vmem:[%s172 + $0x298] sm:$0xff] %vm354, %v2238
      %2329 = vst [vmem:[%s172 + $0x2a0] sm:$0xff] %v2239
      %2330 = vst.msk [vmem:[%s172 + $0x2a8] sm:$0xff] %vm354, %v2240
      %2331 = vst [vmem:[%s172 + $0x2b0] sm:$0xff] %v2241
      %2332 = vst.msk [vmem:[%s172 + $0x2b8] sm:$0xff] %vm354, %v2242
      %2333 = vst [vmem:[%s172 + $0x2c0] sm:$0xff] %v2243
      %2334 = vst.msk [vmem:[%s172 + $0x2c8] sm:$0xff] %vm354, %v2244
      %s2335 = smul.u32 45, %s13
      %p2336 = scmp.lt.s32.totalorder %s2335, 89
      %s2337 = scalar_select %p2336, %s2335, 89
      %s2338 = smul.addr %s2337, 2
      %s2339 = smul.addr %s2338, 8
      %s2340 = scalar_lea.vmem %s2, %s2339
      // Predicated region
      $region29: #{tpu_custom_call.1} parent=27 // pred_check
        %p2341 = pneg %p83
      $region30: #{tpu_custom_call.1} parent=27 // pred_check_branch
        %2343 = sbr.rel (%p2341) target = $region32
      $region31: #{tpu_custom_call.1} parent=27 // pred_region
        %s2344 = smul.u32 45, %s13
      $region32: #{tpu_custom_call.1} parent=27 // pred_fallthru
        _
    $region28: #{tpu_custom_call.1} parent=5 // pred_fallthru
      _
    %p2345 = scmp.le.s32.totalorder 2, %s8
    // Predicated region
    $region33: #{tpu_custom_call.1} parent=5 // pred_check
      %p2346 = pneg %p2345
    $region34: #{tpu_custom_call.1} parent=5 // pred_check_branch
      %2348 = sbr.rel (%p2346) target = $region36
    $region35: #{tpu_custom_call.1} parent=5 // pred_region
      %s2349 = ssub.s32 %s8, 2
      // Predicated region
      $region37: #{tpu_custom_call.1} parent=35 // pred_check
        %p2350 = pneg %p89
      $region38: #{tpu_custom_call.1} parent=35 // pred_check_branch
        %2352 = sbr.rel (%p2350) target = $region40
      $region39: #{tpu_custom_call.1} parent=35 // pred_region
        %s2353 = smul.u32 45, %s14
        %p2354 = scmp.lt.s32.totalorder %s2353, 89
        %s2355 = scalar_select %p2354, %s2353, 89
        %s2356 = smul.addr %s2355, 2
        %s2357 = smul.addr %s2356, 8
        %s2358 = scalar_lea.vmem %s2, %s2357
      $region40: #{tpu_custom_call.1} parent=35 // pred_fallthru
        _
    $region36: #{tpu_custom_call.1} parent=5 // pred_fallthru
      _
  $region6: #{tpu_custom_call.1} parent=0 // loop_footer
    %s12 = sadd.s32 1, %s8
  $region7: #{tpu_custom_call.1} parent=0 // loop_footer_branch
    %7 = sbr.rel target = $region3
  $region8: #{tpu_custom_call.1} parent=0 // loop_exit
    _

</llo_original>
